<compile_context>
chip_gen: v7x
topology: tpu7x:2x2x1
jax: 0.10.0
libtpu: 0.0.40
codegen_flags: <defaults>
</compile_context>

<pallas_src>
import functools
import math

import jax
import jax.numpy as jnp
import numpy as np
from jax import lax
from jax.experimental import pallas as pl
from jax.experimental.pallas import tpu as pltpu


# ----------------------------- kernel helpers --------------------------------

def _layer_norm(x, w, b, eps=1e-5):
    mean = jnp.mean(x, axis=-1, keepdims=True)
    xc = x - mean
    var = jnp.mean(xc * xc, axis=-1, keepdims=True)
    return xc * lax.rsqrt(var + eps) * w + b


def _gelu_exact(x):
    # PyTorch activation='gelu' (approximate='none') -> erf-based GELU
    return 0.5 * x * (1.0 + lax.erf(x * (1.0 / math.sqrt(2.0))))


_NT = (((1,), (1,)), ((), ()))        # dot_general dims: contract last of both (A @ B^T)


# --------------------------- pass 1: K/V projection ---------------------------

def _kv_proj_kernel(nhead,
                    x_ref, nw_ref, nb_ref, n1w_ref, n1b_ref,
                    wk_ref, bk_ref, wv_ref, bv_ref,
                    k_ref, v_ref):
    x = x_ref[0]                                       # (tkv, D) f32
    tkv, D = x.shape
    hd = D // nhead

    y = _layer_norm(x, nw_ref[0], nb_ref[0])           # outer residual-skip LN (f32)
    y1 = _layer_norm(y, n1w_ref[0], n1b_ref[0]).astype(jnp.bfloat16)   # layer.norm1

    # K^T = Wk @ y1^T, V^T = Wv @ y1^T  (NT dot_general: contraction along lanes of
    # both operands -> MXU-native, no explicit transposes).  f32 accumulation.
    kT = lax.dot_general(wk_ref[...], y1, _NT,
                         preferred_element_type=jnp.float32) + bk_ref[...]
    vT = lax.dot_general(wv_ref[...], y1, _NT,
                         preferred_element_type=jnp.float32) + bv_ref[...]

    # (D, tkv) -> (H, hd, tkv): splits the major (sublane) dim only, lane dim stays
    # the lane-dense sequence tile.  Stored bf16.
    k_ref[0] = kT.reshape(nhead, hd, tkv).astype(k_ref.dtype)
    v_ref[0] = vT.reshape(nhead, hd, tkv).astype(v_ref.dtype)


# ----------- pass 2: flash attention + out_proj + FFN + residuals -------------

def _attn_ffn_kernel(nhead,
                     x_ref, k_ref, v_ref,
                     nw_ref, nb_ref, n1w_ref, n1b_ref,
                     wq_ref, bq_ref, wo_ref, bo_ref,
                     n2w_ref, n2b_ref, w1_ref, b1_ref, w2_ref, b2_ref,
                     o_ref,
                     y_sc, q_sc, acc_sc, m_sc, l_sc):
    ki = pl.program_id(2)
    tq, D = y_sc.shape
    hd = D // nhead

    @pl.when(ki == 0)
    def _init():
        x = x_ref[0]
        y = _layer_norm(x, nw_ref[0], nb_ref[0])
        y_sc[...] = y
        y1 = _layer_norm(y, n1w_ref[0], n1b_ref[0]).astype(jnp.bfloat16)
        # Per-head Q projection from pre-split (H, D, hd) weights -> no in-kernel
        # lane slicing.  1/sqrt(head_dim) is folded into wq/bq (prepare_params).
        for h in range(nhead):                         # static unroll, once per q-tile
            qh = jnp.dot(y1, wq_ref[h],
                         preferred_element_type=jnp.float32) + bq_ref[h]
            q_sc[h] = qh.astype(q_sc.dtype)
        m_sc[...] = jnp.full(m_sc.shape, -jnp.inf, m_sc.dtype)
        l_sc[...] = jnp.zeros(l_sc.shape, l_sc.dtype)
        acc_sc[...] = jnp.zeros(acc_sc.shape, acc_sc.dtype)

    # ----- online-softmax accumulation over this kv tile (all heads batched) -----
    q = q_sc[...]                                      # (H, tq, hd)   bf16, pre-scaled
    kT = k_ref[0]                                      # (H, hd, tkv)  bf16 (K^T)
    vT = v_ref[0]                                      # (H, hd, tkv)  bf16 (V^T)

    s = jnp.einsum("hqd,hdk->hqk", q, kT, preferred_element_type=jnp.float32)
    m_prev = m_sc[...]                                 # (H, tq)  dense 2-D stats
    m_new = jnp.maximum(m_prev, jnp.max(s, axis=-1))   # (H, tq)
    alpha = jnp.exp(m_prev - m_new)                    # (H, tq)
    # TODO(synk): on v6e/v7x the exp could run in bf16 on the EUP (~2x throughput);
    #             kept in f32 here for accuracy and v5e portability.  P itself is
    #             cast to bf16 so the PV matmul uses the MXU fast path.
    p = jnp.exp(s - m_new[:, :, None])                 # (H, tq, tkv) f32
    l_sc[...] = alpha * l_sc[...] + jnp.sum(p, axis=-1)
    acc_sc[...] = alpha[:, :, None] * acc_sc[...] + jnp.einsum(
        "hqk,hdk->hqd", p.astype(jnp.bfloat16), vT,
        preferred_element_type=jnp.float32)
    m_sc[...] = m_new

    @pl.when(ki == pl.num_programs(2) - 1)
    def _finalize():
        x = x_ref[0]
        y = y_sc[...]

        # Softmax denominator: EUP reciprocal estimate + one Newton step.
        l = l_sc[...]
        inv = pl.reciprocal(l, approx=True)
        inv = inv * (2.0 - l * inv)                    # (H, tq)

        # out_proj folded per head: attn = sum_h o_h @ Wo_h with Wo pre-split to
        # (H, hd, D).  One K=hd matmul per head, once per q-tile (a single fused
        # (tq,D)@(D,D) matmul would need a head->lane relayout of acc costing about
        # as much as the MXU underfill it removes).
        attn = jnp.zeros((tq, D), jnp.float32)
        for h in range(nhead):                         # static unroll
            o_h = (acc_sc[h] * inv[h][:, None]).astype(jnp.bfloat16)
            attn = attn + jnp.dot(o_h, wo_ref[h], preferred_element_type=jnp.float32)
        attn = attn + bo_ref[0]

        z = y + attn                                   # first residual inside the layer

        # ----- feed-forward sub-block (norm_first), bf16 matmuls + f32 acc -----
        # TODO(synk): for d_model >= 1024 tile the dff (4*D) axis (emit_pipeline over
        #             column blocks of w1/w2 kept in HBM, GELU fused per tile) so the
        #             weight VMEM residency stays bounded on v7x's 64 MiB.
        y2 = _layer_norm(z, n2w_ref[0], n2b_ref[0])
        h1 = jnp.dot(y2.astype(jnp.bfloat16), w1_ref[...],
                     preferred_element_type=jnp.float32) + b1_ref[0]
        h1 = _gelu_exact(h1)
        ff = jnp.dot(h1.astype(jnp.bfloat16), w2_ref[...],
                     preferred_element_type=jnp.float32) + b2_ref[0]

        # out = x + (z + ff)   (outer residual skip of the module)
        o_ref[0] = (x + z + ff).astype(o_ref.dtype)


# -------------------------------- wrappers ------------------------------------

def prepare_params(params, nhead):
    """One-time weight preparation: QKV split, per-head reshapes, scale folding,
    bf16 casts for the matmul weights (LN params and biases stay f32)."""
    D = params["norm_w"].shape[0]
    assert D % nhead == 0
    hd = D // nhead
    scale = 1.0 / math.sqrt(hd)
    bf = jnp.bfloat16
    wq = params["in_proj_w"][0:D]
    wk = params["in_proj_w"][D:2 * D]
    wv = params["in_proj_w"][2 * D:3 * D]
    bq = params["in_proj_b"][0:D]
    bk = params["in_proj_b"][D:2 * D]
    bv = params["in_proj_b"][2 * D:3 * D]
    row = lambda a: a.reshape(1, -1).astype(jnp.float32)
    return {
        "norm_w": row(params["norm_w"]), "norm_b": row(params["norm_b"]),
        "n1_w": row(params["n1_w"]), "n1_b": row(params["n1_b"]),
        "n2_w": row(params["n2_w"]), "n2_b": row(params["n2_b"]),
        # Q projection, per-head (H, D, hd), softmax scale folded in.
        "wq_h": (jnp.transpose(wq) * scale).reshape(D, nhead, hd)
                                            .transpose(1, 0, 2).astype(bf),
        "bq_h": (bq * scale).reshape(nhead, 1, hd).astype(jnp.float32),
        # K/V projections kept in (out, in) layout: pass 1 computes W @ y^T directly.
        "wk": wk.astype(bf), "bk": bk.reshape(D, 1).astype(jnp.float32),
        "wv": wv.astype(bf), "bv": bv.reshape(D, 1).astype(jnp.float32),
        # out_proj per-head: (H, hd, D) so attn = sum_h o_h @ wo_h.
        "wo_h": jnp.transpose(params["out_proj_w"]).reshape(nhead, hd, D).astype(bf),
        "bo": row(params["out_proj_b"]),
        "w1_t": jnp.transpose(params["lin1_w"]).astype(bf), "b1": row(params["lin1_b"]),
        "w2_t": jnp.transpose(params["lin2_w"]).astype(bf), "b2": row(params["lin2_b"]),
    }


def _bytes(shape, dtype):
    """Rough VMEM bytes of one tile, including (8,128) layout padding."""
    dims = list(shape)
    if len(dims) >= 1:
        dims[-1] = -(-int(dims[-1]) // 128) * 128
    if len(dims) >= 2:
        dims[-2] = -(-int(dims[-2]) // 8) * 8
    n = 1
    for d in dims:
        n *= int(d)
    return n * np.dtype(dtype).itemsize


def _vmem_limit_bytes(block_bytes, scratch_bytes):
    # Derive the scoped-VMEM request from the actual working set instead of
    # hardcoding 64 MiB (the entire physical VMEM of a v7x TensorCore).  Pipeline
    # blocks are double-buffered; add headroom for compiler-internal scratch.
    need = 2 * block_bytes + scratch_bytes
    limit = int(need * 1.5) + (8 << 20)
    return max(32 << 20, min(limit, 48 << 20))   # <= 75% of v7x's 64 MiB physical VMEM


def _compiler_params(dim_sem, vmem_limit):
    return pltpu.CompilerParams(dimension_semantics=dim_sem,
                                vmem_limit_bytes=int(vmem_limit))


@functools.lru_cache(maxsize=None)
def _single_buffering_supported():
    """Probe whether BlockSpec(pipeline_mode=pl.Buffered(1)) lowers and runs here.

    Compiled once on a tiny dedicated kernel; a failure only disables the
    single-buffering optimization for constant weight blocks.  The real kernels
    are never built inside a try/except, so genuine errors are not masked."""
    if not hasattr(pl, "Buffered"):
        return False

    def probe(x_ref, w_ref, b_ref, o_ref):
        o_ref[...] = x_ref[...] + w_ref[...] + jnp.sum(b_ref[...])

    try:
        fn = pl.pallas_call(
            probe,
            grid=(2,),
            in_specs=[pl.BlockSpec((8, 128), lambda i: (i, 0)),
                      pl.BlockSpec((8, 128), lambda i: (0, 0),
                                   pipeline_mode=pl.Buffered(1)),
                      pl.BlockSpec((4, 1, 64), lambda i: (0, 0, 0),
                                   pipeline_mode=pl.Buffered(1))],
            out_specs=pl.BlockSpec((8, 128), lambda i: (i, 0)),
            out_shape=jax.ShapeDtypeStruct((16, 128), jnp.float32))
        got = jax.block_until_ready(fn(jnp.ones((16, 128), jnp.float32),
                                       jnp.ones((8, 128), jnp.float32),
                                       jnp.ones((4, 1, 64), jnp.float32)))
        return bool(np.allclose(np.asarray(got), 2.0 + 4 * 64))
    except Exception:   # capability probe only -- see docstring.
        return False


def _forward(x, p, nhead, *, q_tile, kv_tile, single_buffer_weights):
    B, S, D = x.shape
    assert D % nhead == 0
    hd = D // nhead
    assert hd % 8 == 0, "head_dim must be a multiple of 8 (sublane tile)"

    # Tile defaults: kv_tile 512 amortizes per-grid-step overhead and feeds the
    # 256-deep MXU on v6e/v7x; q_tile 256 keeps the resident q/acc scratch modest.
    # (On v5e, pass q_tile=kv_tile=256 explicitly when tuning.)
    if q_tile is None:
        q_tile = min(S, 256)
    if kv_tile is None:
        kv_tile = min(S, 512)
    assert S % q_tile == 0 and S % kv_tile == 0, "sequence length must divide tiles"
    # TODO(synk): ragged / padded sequences would need masking of the scores before
    #             the max/exp; only exact tile multiples are supported here.

    def wspec(shape):
        index_map = (lambda *args, _n=len(shape): (0,) * _n)
        if single_buffer_weights:
            # Constant blocks never change: single-buffer them to halve weight VMEM.
            return pl.BlockSpec(shape, index_map, pipeline_mode=pl.Buffered(1))
        return pl.BlockSpec(shape, index_map)

    # ------------- pass 1: K/V projection (transposed, lane-dense, bf16) -------------
    kv_weights = (p["norm_w"], p["norm_b"], p["n1_w"], p["n1_b"],
                  p["wk"], p["bk"], p["wv"], p["bv"])
    blk1 = (_bytes((kv_tile, D), jnp.float32)
            + 2 * _bytes((nhead, hd, kv_tile), jnp.bfloat16)
            + sum(_bytes(w.shape, w.dtype) for w in kv_weights))
    k, v = pl.pallas_call(
        functools.partial(_kv_proj_kernel, nhead),
        grid=(B, S // kv_tile),
        in_specs=[pl.BlockSpec((1, kv_tile, D), lambda b, s: (b, s, 0))]
                 + [wspec(w.shape) for w in kv_weights],
        out_specs=[pl.BlockSpec((1, nhead, hd, kv_tile), lambda b, s: (b, 0, 0, s)),
                   pl.BlockSpec((1, nhead, hd, kv_tile), lambda b, s: (b, 0, 0, s))],
        out_shape=[jax.ShapeDtypeStruct((B, nhead, hd, S), jnp.bfloat16),
                   jax.ShapeDtypeStruct((B, nhead, hd, S), jnp.bfloat16)],
        compiler_params=_compiler_params(("parallel", "parallel"),
                                         _vmem_limit_bytes(blk1, 0)),
    )(x, *kv_weights)

    # --------- pass 2: flash attention + out_proj + FFN + residuals -------------------
    attn_weights = (p["norm_w"], p["norm_b"], p["n1_w"], p["n1_b"],
                    p["wq_h"], p["bq_h"], p["wo_h"], p["bo"],
                    p["n2_w"], p["n2_b"], p["w1_t"], p["b1"], p["w2_t"], p["b2"])
    blk2 = (_bytes((q_tile, D), x.dtype)
            + 2 * _bytes((nhead, hd, kv_tile), jnp.bfloat16)
            + _bytes((q_tile, D), x.dtype)
            + sum(_bytes(w.shape, w.dtype) for w in attn_weights))
    scr2 = (_bytes((q_tile, D), jnp.float32)
            + _bytes((nhead, q_tile, hd), jnp.bfloat16)
            + _bytes((nhead, q_tile, hd), jnp.float32)
            + 2 * _bytes((nhead, q_tile), jnp.float32))
    out = pl.pallas_call(
        functools.partial(_attn_ffn_kernel, nhead),
        # (b, qi) leading + "parallel" so v7x's two TensorCores split independent
        # query tiles; the kv axis is the online-softmax reduction ("arbitrary").
        grid=(B, S // q_tile, S // kv_tile),
        in_specs=[pl.BlockSpec((1, q_tile, D), lambda b, qi, ki: (b, qi, 0)),
                  pl.BlockSpec((1, nhead, hd, kv_tile), lambda b, qi, ki: (b, 0, 0, ki)),
                  pl.BlockSpec((1, nhead, hd, kv_tile), lambda b, qi, ki: (b, 0, 0, ki))]
                 + [wspec(w.shape) for w in attn_weights],
        out_specs=pl.BlockSpec((1, q_tile, D), lambda b, qi, ki: (b, qi, 0)),
        out_shape=jax.ShapeDtypeStruct((B, S, D), x.dtype),
        scratch_shapes=[pltpu.VMEM((q_tile, D), jnp.float32),           # y (outer LN)
                        pltpu.VMEM((nhead, q_tile, hd), jnp.bfloat16),  # q (scaled)
                        pltpu.VMEM((nhead, q_tile, hd), jnp.float32),   # acc
                        pltpu.VMEM((nhead, q_tile), jnp.float32),       # m (dense 2-D)
                        pltpu.VMEM((nhead, q_tile), jnp.float32)],      # l (dense 2-D)
        compiler_params=_compiler_params(("parallel", "parallel", "arbitrary"),
                                         _vmem_limit_bytes(blk2, scr2)),
    )(x, k, v, *attn_weights)
    return out


def residual_transformer_encoder_layer(x, prepped, nhead, *, q_tile=None, kv_tile=None):
    return _forward(x, prepped, nhead, q_tile=q_tile, kv_tile=kv_tile,
                    single_buffer_weights=_single_buffering_supported())


# ----------------------------- pure-JAX reference -----------------------------

def reference(x, p, nhead):
    def ln(v, w, b, eps=1e-5):
        m = jnp.mean(v, -1, keepdims=True)
        var = jnp.mean((v - m) ** 2, -1, keepdims=True)
        return (v - m) / jnp.sqrt(var + eps) * w + b

    B, S, D = x.shape
    hd = D // nhead
    y = ln(x, p["norm_w"], p["norm_b"])
    y1 = ln(y, p["n1_w"], p["n1_b"])
    qkv = y1 @ p["in_proj_w"].T + p["in_proj_b"]
    q, k, v = jnp.split(qkv, 3, axis=-1)
    q = q.reshape(B, S, nhead, hd).transpose(0, 2, 1, 3)
    k = k.reshape(B, S, nhead, hd).transpose(0, 2, 1, 3)
    v = v.reshape(B, S, nhead, hd).transpose(0, 2, 1, 3)
    s = jnp.einsum("bhqd,bhkd->bhqk", q, k) / jnp.sqrt(hd)
    a = jax.nn.softmax(s, axis=-1)
    o = jnp.einsum("bhqk,bhkd->bhqd", a, v).transpose(0, 2, 1, 3).reshape(B, S, D)
    attn = o @ p["out_proj_w"].T + p["out_proj_b"]
    z = y + attn
    y2 = ln(z, p["n2_w"], p["n2_b"])
    h = y2 @ p["lin1_w"].T + p["lin1_b"]
    h = 0.5 * h * (1.0 + lax.erf(h / jnp.sqrt(2.0)))
    ff = h @ p["lin2_w"].T + p["lin2_b"]
    z = z + ff
    return x + z


# ---------------------------------- main ---------------------------------------

if __name__ == "__main__":
    B, S, D, NHEAD = 2, 256, 256, 4
    DFF = 4 * D

    key = jax.random.PRNGKey(0)
    keys = jax.random.split(key, 9)

    params = {
        "norm_w": jnp.ones((D,), jnp.float32),
        "norm_b": jnp.zeros((D,), jnp.float32),
        "n1_w": jnp.ones((D,), jnp.float32),
        "n1_b": jnp.zeros((D,), jnp.float32),
        "n2_w": jnp.ones((D,), jnp.float32),
        "n2_b": jnp.zeros((D,), jnp.float32),
        "in_proj_w": 0.05 * jax.random.normal(keys[0], (3 * D, D), jnp.float32),
        "in_proj_b": 0.01 * jax.random.normal(keys[1], (3 * D,), jnp.float32),
        "out_proj_w": 0.05 * jax.random.normal(keys[2], (D, D), jnp.float32),
        "out_proj_b": 0.01 * jax.random.normal(keys[3], (D,), jnp.float32),
        "lin1_w": 0.05 * jax.random.normal(keys[4], (DFF, D), jnp.float32),
        "lin1_b": 0.01 * jax.random.normal(keys[5], (DFF,), jnp.float32),
        "lin2_w": 0.05 * jax.random.normal(keys[6], (D, DFF), jnp.float32),
        "lin2_b": 0.01 * jax.random.normal(keys[7], (D,), jnp.float32),
    }

    x = jax.random.normal(keys[8], (B, S, D), jnp.float32)

    # Weight split / per-head reshapes / scale folding / bf16 casts hoisted here.
    prepped = prepare_params(params, NHEAD)

    # Small tiles deliberately exercise the multi-tile online-softmax path
    # (production defaults are q_tile=min(S,256), kv_tile=min(S,512)).
    out = residual_transformer_encoder_layer(x, prepped, NHEAD, q_tile=128, kv_tile=128)
    out = jax.block_until_ready(out)

    ref = jax.block_until_ready(reference(x, params, NHEAD))
    # Tolerance accommodates bf16 weights / K / V / P matmuls with f32 accumulation
    # (per the performance review) plus the approx-reciprocal (+Newton) softmax norm.
    np.testing.assert_allclose(np.asarray(out, np.float32), np.asarray(ref),
                               rtol=3e-2, atol=3e-2)

    print("KERNEL_OK")
</pallas_src>

<mosaic_0001>
module attributes {stable_mosaic.version = 11 : i64} {
  func.func @probe(%arg0: i32, %arg1: memref<8x128xf32, #tpu.memory_space<vmem>>, %arg2: memref<8x128xf32, #tpu.memory_space<vmem>>, %arg3: memref<4x1x64xf32, #tpu.memory_space<vmem>>, %arg4: memref<8x128xf32, #tpu.memory_space<vmem>>) attributes {dimension_semantics = [#tpu.dimension_semantics<arbitrary>], iteration_bounds = array<i64: 2>, scalar_prefetch = 0 : i64, scratch_operands = 0 : i64, tpu.core_type = #tpu.core_type<tc>, window_params = [{transform_indices = @transform_0, window_bounds = array<i64: 8, 128>}, {pipeline_mode = #tpu.pipeline_mode<synchronous>, transform_indices = @transform_1, window_bounds = array<i64: 8, 128>}, {pipeline_mode = #tpu.pipeline_mode<synchronous>, transform_indices = @transform_2, window_bounds = array<i64: 4, 1, 64>}, {transform_indices = @transform_3, window_bounds = array<i64: 8, 128>}]} {
    %c0 = arith.constant 0 : index
    %c0_0 = arith.constant 0 : index
    %0 = vector.load %arg1[%c0, %c0_0] : memref<8x128xf32, #tpu.memory_space<vmem>>, vector<8x128xf32>
    %c0_1 = arith.constant 0 : index
    %c0_2 = arith.constant 0 : index
    %1 = vector.load %arg2[%c0_1, %c0_2] : memref<8x128xf32, #tpu.memory_space<vmem>>, vector<8x128xf32>
    %2 = arith.addf %0, %1 : vector<8x128xf32>
    %c0_3 = arith.constant 0 : index
    %c0_4 = arith.constant 0 : index
    %c0_5 = arith.constant 0 : index
    %3 = vector.load %arg3[%c0_3, %c0_4, %c0_5] : memref<4x1x64xf32, #tpu.memory_space<vmem>>, vector<4x1x64xf32>
    %4 = vector.shape_cast %3 : vector<4x1x64xf32> to vector<1x4x1x64xf32>
    %cst = arith.constant dense<0.000000e+00> : vector<1xf32>
    %5 = vector.multi_reduction <add>, %4, %cst [1, 2, 3] : vector<1x4x1x64xf32> to vector<1xf32>
    %6 = vector.shape_cast %5 : vector<1xf32> to vector<1x1x1x1xf32>
    %7 = vector.extract %6[0, 0, 0, 0] : f32 from vector<1x1x1x1xf32>
    %8 = vector.broadcast %7 : f32 to vector<8x128xf32>
    %9 = arith.addf %2, %8 : vector<8x128xf32>
    %c0_6 = arith.constant 0 : index
    %c0_7 = arith.constant 0 : index
    %10 = vector.load %arg4[%c0_6, %c0_7] : memref<8x128xf32, #tpu.memory_space<vmem>>, vector<8x128xf32>
    tpu.vector_store %arg4[%c0_6, %c0_7], %9 {strides = array<i32>} : memref<8x128xf32, #tpu.memory_space<vmem>>, vector<8x128xf32>,
    return
  }
  func.func @transform_0(%arg0: i32) -> (i32, i32) {
    %c0_i32 = arith.constant 0 : i32
    %c0_i32_0 = arith.constant 0 : i32
    return %arg0, %c0_i32 : i32, i32
  }
  func.func @transform_1(%arg0: i32) -> (i32, i32) {
    %c0_i32 = arith.constant 0 : i32
    %c0_i32_0 = arith.constant 0 : i32
    %c0_i32_1 = arith.constant 0 : i32
    return %c0_i32, %c0_i32_0 : i32, i32
  }
  func.func @transform_2(%arg0: i32) -> (i32, i32, i32) {
    %c0_i32 = arith.constant 0 : i32
    %c0_i32_0 = arith.constant 0 : i32
    %c0_i32_1 = arith.constant 0 : i32
    %c0_i32_2 = arith.constant 0 : i32
    return %c0_i32, %c0_i32_0, %c0_i32_1 : i32, i32, i32
  }
  func.func @transform_3(%arg0: i32) -> (i32, i32) {
    %c0_i32 = arith.constant 0 : i32
    %c0_i32_0 = arith.constant 0 : i32
    return %arg0, %c0_i32 : i32, i32
  }
}

module attributes {stable_mosaic.version = 11 : i64} {
  func.func @_kv_proj_kernel(%arg0: i32, %arg1: i32, %arg2: memref<1x128x256xf32, #tpu.memory_space<vmem>>, %arg3: memref<1x256xf32, #tpu.memory_space<vmem>>, %arg4: memref<1x256xf32, #tpu.memory_space<vmem>>, %arg5: memref<1x256xf32, #tpu.memory_space<vmem>>, %arg6: memref<1x256xf32, #tpu.memory_space<vmem>>, %arg7: memref<256x256xbf16, #tpu.memory_space<vmem>>, %arg8: memref<256x1xf32, #tpu.memory_space<vmem>>, %arg9: memref<256x256xbf16, #tpu.memory_space<vmem>>, %arg10: memref<256x1xf32, #tpu.memory_space<vmem>>, %arg11: memref<1x4x64x128xbf16, #tpu.memory_space<vmem>>, %arg12: memref<1x4x64x128xbf16, #tpu.memory_space<vmem>>) attributes {dimension_semantics = [#tpu.dimension_semantics<parallel>, #tpu.dimension_semantics<parallel>], iteration_bounds = array<i64: 2, 2>, scalar_prefetch = 0 : i64, scratch_operands = 0 : i64, tpu.core_type = #tpu.core_type<tc>, window_params = [{transform_indices = @transform_0, window_bounds = array<i64: 1, 128, 256>}, {pipeline_mode = #tpu.pipeline_mode<synchronous>, transform_indices = @transform_1, window_bounds = array<i64: 1, 256>}, {pipeline_mode = #tpu.pipeline_mode<synchronous>, transform_indices = @transform_2, window_bounds = array<i64: 1, 256>}, {pipeline_mode = #tpu.pipeline_mode<synchronous>, transform_indices = @transform_3, window_bounds = array<i64: 1, 256>}, {pipeline_mode = #tpu.pipeline_mode<synchronous>, transform_indices = @transform_4, window_bounds = array<i64: 1, 256>}, {pipeline_mode = #tpu.pipeline_mode<synchronous>, transform_indices = @transform_5, window_bounds = array<i64: 256, 256>}, {pipeline_mode = #tpu.pipeline_mode<synchronous>, transform_indices = @transform_6, window_bounds = array<i64: 256, 1>}, {pipeline_mode = #tpu.pipeline_mode<synchronous>, transform_indices = @transform_7, window_bounds = array<i64: 256, 256>}, {pipeline_mode = #tpu.pipeline_mode<synchronous>, transform_indices = @transform_8, window_bounds = array<i64: 256, 1>}, {transform_indices = @transform_9, window_bounds = array<i64: 1, 4, 64, 128>}, {transform_indices = @transform_10, window_bounds = array<i64: 1, 4, 64, 128>}]} {
    %c0 = arith.constant 0 : index
    %c0_0 = arith.constant 0 : index
    %c0_1 = arith.constant 0 : index
    %0 = vector.load %arg2[%c0, %c0_0, %c0_1] : memref<1x128x256xf32, #tpu.memory_space<vmem>>, vector<1x128x256xf32>
    %1 = vector.shape_cast %0 : vector<1x128x256xf32> to vector<128x256xf32>
    %c0_2 = arith.constant 0 : index
    %c0_3 = arith.constant 0 : index
    %2 = vector.load %arg3[%c0_2, %c0_3] : memref<1x256xf32, #tpu.memory_space<vmem>>, vector<1x256xf32>
    %3 = vector.shape_cast %2 : vector<1x256xf32> to vector<256xf32>
    %c0_4 = arith.constant 0 : index
    %c0_5 = arith.constant 0 : index
    %4 = vector.load %arg4[%c0_4, %c0_5] : memref<1x256xf32, #tpu.memory_space<vmem>>, vector<1x256xf32>
    %5 = vector.shape_cast %4 : vector<1x256xf32> to vector<256xf32>
    %cst = arith.constant dense<0.000000e+00> : vector<128xf32>
    %6 = vector.multi_reduction <add>, %1, %cst [1] : vector<128x256xf32> to vector<128xf32>
    %7 = vector.shape_cast %6 : vector<128xf32> to vector<128x1xf32>
    %cst_6 = arith.constant 2.560000e+02 : f32
    %8 = vector.broadcast %cst_6 : f32 to vector<128x1xf32>
    %9 = arith.divf %7, %8 : vector<128x1xf32>
    %10 = vector.broadcast %9 : vector<128x1xf32> to vector<128x256xf32>
    %11 = arith.subf %1, %10 : vector<128x256xf32>
    %12 = arith.mulf %11, %11 : vector<128x256xf32>
    %cst_7 = arith.constant dense<0.000000e+00> : vector<128xf32>
    %13 = vector.multi_reduction <add>, %12, %cst_7 [1] : vector<128x256xf32> to vector<128xf32>
    %14 = vector.shape_cast %13 : vector<128xf32> to vector<128x1xf32>
    %cst_8 = arith.constant 2.560000e+02 : f32
    %15 = vector.broadcast %cst_8 : f32 to vector<128x1xf32>
    %16 = arith.divf %14, %15 : vector<128x1xf32>
    %cst_9 = arith.constant 9.99999974E-6 : f32
    %17 = vector.broadcast %cst_9 : f32 to vector<128x1xf32>
    %18 = arith.addf %16, %17 : vector<128x1xf32>
    %19 = math.rsqrt %18 : vector<128x1xf32>
    %20 = vector.broadcast %19 : vector<128x1xf32> to vector<128x256xf32>
    %21 = arith.mulf %11, %20 : vector<128x256xf32>
    %22 = vector.shape_cast %3 : vector<256xf32> to vector<1x256xf32>
    %23 = vector.broadcast %22 : vector<1x256xf32> to vector<128x256xf32>
    %24 = arith.mulf %21, %23 : vector<128x256xf32>
    %25 = vector.shape_cast %5 : vector<256xf32> to vector<1x256xf32>
    %26 = vector.broadcast %25 : vector<1x256xf32> to vector<128x256xf32>
    %27 = arith.addf %24, %26 : vector<128x256xf32>
    %c0_10 = arith.constant 0 : index
    %c0_11 = arith.constant 0 : index
    %28 = vector.load %arg5[%c0_10, %c0_11] : memref<1x256xf32, #tpu.memory_space<vmem>>, vector<1x256xf32>
    %29 = vector.shape_cast %28 : vector<1x256xf32> to vector<256xf32>
    %c0_12 = arith.constant 0 : index
    %c0_13 = arith.constant 0 : index
    %30 = vector.load %arg6[%c0_12, %c0_13] : memref<1x256xf32, #tpu.memory_space<vmem>>, vector<1x256xf32>
    %31 = vector.shape_cast %30 : vector<1x256xf32> to vector<256xf32>
    %cst_14 = arith.constant dense<0.000000e+00> : vector<128xf32>
    %32 = vector.multi_reduction <add>, %27, %cst_14 [1] : vector<128x256xf32> to vector<128xf32>
    %33 = vector.shape_cast %32 : vector<128xf32> to vector<128x1xf32>
    %cst_15 = arith.constant 2.560000e+02 : f32
    %34 = vector.broadcast %cst_15 : f32 to vector<128x1xf32>
    %35 = arith.divf %33, %34 : vector<128x1xf32>
    %36 = vector.broadcast %35 : vector<128x1xf32> to vector<128x256xf32>
    %37 = arith.subf %27, %36 : vector<128x256xf32>
    %38 = arith.mulf %37, %37 : vector<128x256xf32>
    %cst_16 = arith.constant dense<0.000000e+00> : vector<128xf32>
    %39 = vector.multi_reduction <add>, %38, %cst_16 [1] : vector<128x256xf32> to vector<128xf32>
    %40 = vector.shape_cast %39 : vector<128xf32> to vector<128x1xf32>
    %cst_17 = arith.constant 2.560000e+02 : f32
    %41 = vector.broadcast %cst_17 : f32 to vector<128x1xf32>
    %42 = arith.divf %40, %41 : vector<128x1xf32>
    %cst_18 = arith.constant 9.99999974E-6 : f32
    %43 = vector.broadcast %cst_18 : f32 to vector<128x1xf32>
    %44 = arith.addf %42, %43 : vector<128x1xf32>
    %45 = math.rsqrt %44 : vector<128x1xf32>
    %46 = vector.broadcast %45 : vector<128x1xf32> to vector<128x256xf32>
    %47 = arith.mulf %37, %46 : vector<128x256xf32>
    %48 = vector.shape_cast %29 : vector<256xf32> to vector<1x256xf32>
    %49 = vector.broadcast %48 : vector<1x256xf32> to vector<128x256xf32>
    %50 = arith.mulf %47, %49 : vector<128x256xf32>
    %51 = vector.shape_cast %31 : vector<256xf32> to vector<1x256xf32>
    %52 = vector.broadcast %51 : vector<1x256xf32> to vector<128x256xf32>
    %53 = arith.addf %50, %52 : vector<128x256xf32>
    %54 = arith.truncf %53 : vector<128x256xf32> to vector<128x256xbf16>
    %c0_19 = arith.constant 0 : index
    %c0_20 = arith.constant 0 : index
    %55 = vector.load %arg7[%c0_19, %c0_20] : memref<256x256xbf16, #tpu.memory_space<vmem>>, vector<256x256xbf16>
    %cst_21 = arith.constant dense<0.000000e+00> : vector<256x128xf32>
    %56 = tpu.matmul %55, %54, %cst_21 {dimension_numbers = #tpu.dot_dimension_numbers<[1], [1], [0], [0], [0, 0, 1, 0], [], []>} : vector<256x256xbf16>, vector<128x256xbf16>, vector<256x128xf32> -> vector<256x128xf32>
    %c0_22 = arith.constant 0 : index
    %c0_23 = arith.constant 0 : index
    %57 = vector.load %arg8[%c0_22, %c0_23] : memref<256x1xf32, #tpu.memory_space<vmem>>, vector<256x1xf32>
    %58 = vector.broadcast %57 : vector<256x1xf32> to vector<256x128xf32>
    %59 = arith.addf %56, %58 : vector<256x128xf32>
    %c0_24 = arith.constant 0 : index
    %c0_25 = arith.constant 0 : index
    %60 = vector.load %arg9[%c0_24, %c0_25] : memref<256x256xbf16, #tpu.memory_space<vmem>>, vector<256x256xbf16>
    %cst_26 = arith.constant dense<0.000000e+00> : vector<256x128xf32>
    %61 = tpu.matmul %60, %54, %cst_26 {dimension_numbers = #tpu.dot_dimension_numbers<[1], [1], [0], [0], [0, 0, 1, 0], [], []>} : vector<256x256xbf16>, vector<128x256xbf16>, vector<256x128xf32> -> vector<256x128xf32>
    %c0_27 = arith.constant 0 : index
    %c0_28 = arith.constant 0 : index
    %62 = vector.load %arg10[%c0_27, %c0_28] : memref<256x1xf32, #tpu.memory_space<vmem>>, vector<256x1xf32>
    %63 = vector.broadcast %62 : vector<256x1xf32> to vector<256x128xf32>
    %64 = arith.addf %61, %63 : vector<256x128xf32>
    %65 = vector.shape_cast %59 : vector<256x128xf32> to vector<4x64x128xf32>
    %66 = arith.truncf %65 : vector<4x64x128xf32> to vector<4x64x128xbf16>
    %c0_29 = arith.constant 0 : index
    %c0_30 = arith.constant 0 : index
    %c0_31 = arith.constant 0 : index
    %c0_32 = arith.constant 0 : index
    %67 = vector.load %arg11[%c0_29, %c0_30, %c0_31, %c0_32] : memref<1x4x64x128xbf16, #tpu.memory_space<vmem>>, vector<1x4x64x128xbf16>
    %68 = vector.shape_cast %67 : vector<1x4x64x128xbf16> to vector<4x64x128xbf16>
    %69 = vector.shape_cast %66 : vector<4x64x128xbf16> to vector<1x4x64x128xbf16>
    tpu.vector_store %arg11[%c0_29, %c0_30, %c0_31, %c0_32], %69 {strides = array<i32>} : memref<1x4x64x128xbf16, #tpu.memory_space<vmem>>, vector<1x4x64x128xbf16>,
    %70 = vector.shape_cast %64 : vector<256x128xf32> to vector<4x64x128xf32>
    %71 = arith.truncf %70 : vector<4x64x128xf32> to vector<4x64x128xbf16>
    %c0_33 = arith.constant 0 : index
    %c0_34 = arith.constant 0 : index
    %c0_35 = arith.constant 0 : index
    %c0_36 = arith.constant 0 : index
    %72 = vector.load %arg12[%c0_33, %c0_34, %c0_35, %c0_36] : memref<1x4x64x128xbf16, #tpu.memory_space<vmem>>, vector<1x4x64x128xbf16>
    %73 = vector.shape_cast %72 : vector<1x4x64x128xbf16> to vector<4x64x128xbf16>
    %74 = vector.shape_cast %71 : vector<4x64x128xbf16> to vector<1x4x64x128xbf16>
    tpu.vector_store %arg12[%c0_33, %c0_34, %c0_35, %c0_36], %74 {strides = array<i32>} : memref<1x4x64x128xbf16, #tpu.memory_space<vmem>>, vector<1x4x64x128xbf16>,
    return
  }
  func.func @transform_0(%arg0: i32, %arg1: i32) -> (i32, i32, i32) {
    %c0_i32 = arith.constant 0 : i32
    %c0_i32_0 = arith.constant 0 : i32
    return %arg0, %arg1, %c0_i32 : i32, i32, i32
  }
  func.func @transform_1(%arg0: i32, %arg1: i32) -> (i32, i32) {
    %c0_i32 = arith.constant 0 : i32
    %c0_i32_0 = arith.constant 0 : i32
    %c0_i32_1 = arith.constant 0 : i32
    return %c0_i32, %c0_i32_0 : i32, i32
  }
  func.func @transform_2(%arg0: i32, %arg1: i32) -> (i32, i32) {
    %c0_i32 = arith.constant 0 : i32
    %c0_i32_0 = arith.constant 0 : i32
    %c0_i32_1 = arith.constant 0 : i32
    return %c0_i32, %c0_i32_0 : i32, i32
  }
  func.func @transform_3(%arg0: i32, %arg1: i32) -> (i32, i32) {
    %c0_i32 = arith.constant 0 : i32
    %c0_i32_0 = arith.constant 0 : i32
    %c0_i32_1 = arith.constant 0 : i32
    return %c0_i32, %c0_i32_0 : i32, i32
  }
  func.func @transform_4(%arg0: i32, %arg1: i32) -> (i32, i32) {
    %c0_i32 = arith.constant 0 : i32
    %c0_i32_0 = arith.constant 0 : i32
    %c0_i32_1 = arith.constant 0 : i32
    return %c0_i32, %c0_i32_0 : i32, i32
  }
  func.func @transform_5(%arg0: i32, %arg1: i32) -> (i32, i32) {
    %c0_i32 = arith.constant 0 : i32
    %c0_i32_0 = arith.constant 0 : i32
    %c0_i32_1 = arith.constant 0 : i32
    return %c0_i32, %c0_i32_0 : i32, i32
  }
  func.func @transform_6(%arg0: i32, %arg1: i32) -> (i32, i32) {
    %c0_i32 = arith.constant 0 : i32
    %c0_i32_0 = arith.constant 0 : i32
    %c0_i32_1 = arith.constant 0 : i32
    return %c0_i32, %c0_i32_0 : i32, i32
  }
  func.func @transform_7(%arg0: i32, %arg1: i32) -> (i32, i32) {
    %c0_i32 = arith.constant 0 : i32
    %c0_i32_0 = arith.constant 0 : i32
    %c0_i32_1 = arith.constant 0 : i32
    return %c0_i32, %c0_i32_0 : i32, i32
  }
  func.func @transform_8(%arg0: i32, %arg1: i32) -> (i32, i32) {
    %c0_i32 = arith.constant 0 : i32
    %c0_i32_0 = arith.constant 0 : i32
    %c0_i32_1 = arith.constant 0 : i32
    return %c0_i32, %c0_i32_0 : i32, i32
  }
  func.func @transform_9(%arg0: i32, %arg1: i32) -> (i32, i32, i32, i32) {
    %c0_i32 = arith.constant 0 : i32
    %c0_i32_0 = arith.constant 0 : i32
    %c0_i32_1 = arith.constant 0 : i32
    return %arg0, %c0_i32, %c0_i32_0, %arg1 : i32, i32, i32, i32
  }
  func.func @transform_10(%arg0: i32, %arg1: i32) -> (i32, i32, i32, i32) {
    %c0_i32 = arith.constant 0 : i32
    %c0_i32_0 = arith.constant 0 : i32
    %c0_i32_1 = arith.constant 0 : i32
    return %arg0, %c0_i32, %c0_i32_0, %arg1 : i32, i32, i32, i32
  }
}

</mosaic_0001>

<llo_original>
// kernel: tpu_custom_call.1
$region0: #{tpu_custom_call.1}
  #allocation0 [shape = 'u32[]', space=smem, size = 0x4, offset = 0x4, fixed_abs, tag = 'smem constant byte address 0x4 - core index']
  #allocation1 [shape = 'u32[144,128]{1,0:T(1,128)}', space=vmem, size = 0x12000, scoped, tag = 'internal scratch']
  %s0 = inlined_call_operand.hbm [shape: f32[16,128], index: 0, kind: input, shape index: {}]
  %s1 = inlined_call_operand.hbm [shape: f32[8,128], index: 1, kind: input, shape index: {}]
  %s2 = inlined_call_operand.vmem [shape: f32[4,1,64], index: 2, kind: input, shape index: {}]
  %s3 = inlined_call_operand.hbm [shape: f32[16,128], index: 3, kind: output, shape index: {}]
  %s4 = sld [smem:[#allocation0]]
  $region53: #{tpu_custom_call.1} parent=0
    _
  %s6 = ssub.s32 1, %s4
  %s7 = scalar_select 0, %s6, %s4
  $region1: #{tpu_custom_call.1} parent=0
    #allocation2 [shape = 'u8[8192]{0}', space=vmem, size = 0x2000, scoped, tag = 'input window, operand 0']
    #allocation3 [shape = 's32[2]{0}', space=sflag, size = 0x8, scoped, tag = 'scoped memory for tpu_custom_call.1']
    #allocation4 [shape = 's32[2]{0}', space=sflag, size = 0x8, scoped, tag = 'scoped memory for tpu_custom_call.1']
    #allocation5 [shape = 'u8[4096]{0}', space=vmem, size = 0x1000, scoped, tag = 'input window, operand 1, single buffered']
    #allocation6 [shape = 's32[1]{0}', space=sflag, size = 0x4, scoped, tag = 'scoped memory for tpu_custom_call.1']
    #allocation7 [shape = 'u8[8192]{0}', space=vmem, size = 0x2000, scoped, tag = 'output window, operand 0']
    %8 = vsyncpa [#allocation3], 0
    %s9 = scalar_lea.sflag [#allocation3], 1
    %10 = vsyncpa %s9, 0
    %11 = vsyncpa [#allocation6], 0
    %12 = vsyncpa [#allocation4], 0
    %s13 = scalar_lea.sflag [#allocation4], 1
    %14 = vsyncpa %s13, 0
    loop: start=0, step=1, limit=4
    $region2: #{tpu_custom_call.1} parent=1 // loop_pre_header
      _
    $region3: #{tpu_custom_call.1} parent=1 // loop_header
      %s16 = sphi 0, %s20
      %p17 = scmp.ge.s32.totalorder %s16, 4
      %s26 = sphi 0, %s28
      %s29 = sphi 0, %s26
      %s30 = sphi 0, %s29
      %s46 = sphi 0, %s30
      %s50 = sphi 0, %s50
      %s52 = sphi 0, %s50
      %s53 = sphi 0, %s52
      %s67 = sphi 0, %s53
      %s71 = sphi 0, %s71
      %s73 = sphi 0, %s71
      %s74 = sphi 0, %s73
      %s88 = sphi 0, %s74
      %s94 = sphi 0, %s96
      %s97 = sphi 0, %s94
      %s98 = sphi 0, %s97
      %s114 = sphi 0, %s98
    $region4: #{tpu_custom_call.1} parent=1 // loop_header_branch
      %19 = sbr.rel (%p17) target = $region8
    $region5: #{tpu_custom_call.1} parent=1 // loop_body
      %s21 = ssub.s32 %s16, 1
      %s22 = ssub.s32 %s16, 2
      %s23 = sadd.s32 %s16, 1
      %s24 = ssub.s32 %s16, %s23
      %p25 = scmp.eq.s32.totalorder %s24, 0
      %s27 = sadd.s32 %s26, 1
      %s28 = scalar_select %p25, %s26, %s27
      %p31 = pneg %p25
      %p32 = scmp.eq.s32.totalorder %s16, 1
      %p33 = por %p31, %p32
      %p34 = scmp.ne.s32.totalorder %s26, %s29
      %p35 = scmp.eq.s32.totalorder %s16, 0
      %p36 = por %p34, %p35
      %p37 = scmp.ne.s32.totalorder %s26, %s29
      %p38 = scmp.eq.s32.totalorder %s21, 1
      %p39 = por %p37, %p38
      %p40 = scmp.ne.s32.totalorder %s29, %s30
      %p41 = scmp.eq.s32.totalorder %s21, 0
      %p42 = por %p40, %p41
      %p43 = scmp.ne.s32.totalorder %s29, %s30
      %p44 = scmp.eq.s32.totalorder %s22, 1
      %p45 = por %p43, %p44
      %p47 = scmp.ne.s32.totalorder %s30, %s46
      %p48 = scmp.eq.s32.totalorder %s22, 0
      %p49 = por %p47, %p48
      %s51 = sadd.s32 %s50, 1
      %p54 = scmp.eq.s32.totalorder %s16, 1
      %p55 = scmp.ne.s32.totalorder %s50, %s52
      %p56 = scmp.eq.s32.totalorder %s16, 0
      %p57 = por %p55, %p56
      %p58 = scmp.ne.s32.totalorder %s50, %s52
      %p59 = scmp.eq.s32.totalorder %s21, 1
      %p60 = por %p58, %p59
      %p61 = scmp.ne.s32.totalorder %s52, %s53
      %p62 = scmp.eq.s32.totalorder %s21, 0
      %p63 = por %p61, %p62
      %p64 = scmp.ne.s32.totalorder %s52, %s53
      %p65 = scmp.eq.s32.totalorder %s22, 1
      %p66 = por %p64, %p65
      %p68 = scmp.ne.s32.totalorder %s53, %s67
      %p69 = scmp.eq.s32.totalorder %s22, 0
      %p70 = por %p68, %p69
      %s72 = sadd.s32 %s71, 1
      %p75 = scmp.eq.s32.totalorder %s16, 1
      %p76 = scmp.ne.s32.totalorder %s71, %s73
      %p77 = scmp.eq.s32.totalorder %s16, 0
      %p78 = por %p76, %p77
      %p79 = scmp.ne.s32.totalorder %s71, %s73
      %p80 = scmp.eq.s32.totalorder %s21, 1
      %p81 = por %p79, %p80
      %p82 = scmp.ne.s32.totalorder %s73, %s74
      %p83 = scmp.eq.s32.totalorder %s21, 0
      %p84 = por %p82, %p83
      %p85 = scmp.ne.s32.totalorder %s73, %s74
      %p86 = scmp.eq.s32.totalorder %s22, 1
      %p87 = por %p85, %p86
      %p89 = scmp.ne.s32.totalorder %s74, %s88
      %p90 = scmp.eq.s32.totalorder %s22, 0
      %p91 = por %p89, %p90
      %s92 = ssub.s32 %s16, %s23
      %p93 = scmp.eq.s32.totalorder %s92, 0
      %s95 = sadd.s32 %s94, 1
      %s96 = scalar_select %p93, %s94, %s95
      %p99 = pneg %p93
      %p100 = scmp.eq.s32.totalorder %s16, 1
      %p101 = por %p99, %p100
      %p102 = scmp.ne.s32.totalorder %s94, %s97
      %p103 = scmp.eq.s32.totalorder %s16, 0
      %p104 = por %p102, %p103
      %p105 = scmp.ne.s32.totalorder %s94, %s97
      %p106 = scmp.eq.s32.totalorder %s21, 1
      %p107 = por %p105, %p106
      %p108 = scmp.ne.s32.totalorder %s97, %s98
      %p109 = scmp.eq.s32.totalorder %s21, 0
      %p110 = por %p108, %p109
      %p111 = scmp.ne.s32.totalorder %s97, %s98
      %p112 = scmp.eq.s32.totalorder %s22, 1
      %p113 = por %p111, %p112
      %p115 = scmp.ne.s32.totalorder %s98, %s114
      %p116 = scmp.eq.s32.totalorder %s22, 0
      %p117 = por %p115, %p116
      %p118 = scmp.le.s32.totalorder 1, %s16
      %p119 = scmp.lt.s32.totalorder %s16, 3
      %p120 = pnand %p118, %p119
      %p121 = pneg %p120
      // Predicated region
      $region9: #{tpu_custom_call.1} parent=5 // pred_check
        _
      $region10: #{tpu_custom_call.1} parent=5 // pred_check_branch
        %123 = sbr.rel (%p120) target = $region12
      $region11: #{tpu_custom_call.1} parent=5 // pred_region
        %s124 = ssub.s32 %s16, 1
        // Predicated region
        $region13: #{tpu_custom_call.1} parent=11 // pred_check
          %p125 = pneg %p63
        $region14: #{tpu_custom_call.1} parent=11 // pred_check_branch
          %127 = sbr.rel (%p125) target = $region16
        $region15: #{tpu_custom_call.1} parent=11 // pred_region
          %s129 = ssub.s32 128, 128
          %130 = vsyncadd [#allocation6], %s129
          %s132 = sshll.u32 [#allocation5], 4
          %s133 = int_to_ptr.vmem [resolvable:$true] %s132
          %135 = dma.hbm_to_vmem [thread:$0]  %s1, 128, %s133, [#allocation6]
        $region16: #{tpu_custom_call.1} parent=11 // pred_fallthru
          _
        // Predicated region
        $region17: #{tpu_custom_call.1} parent=11 // pred_check
          %p136 = pneg %p84
        $region18: #{tpu_custom_call.1} parent=11 // pred_check_branch
          %138 = sbr.rel (%p136) target = $region20
        $region19: #{tpu_custom_call.1} parent=11 // pred_region
          _
        $region20: #{tpu_custom_call.1} parent=11 // pred_fallthru
          _
      $region12: #{tpu_custom_call.1} parent=5 // pred_fallthru
        _
      %p139 = scmp.lt.s32.totalorder %s16, 2
      // Predicated region
      $region21: #{tpu_custom_call.1} parent=5 // pred_check
        %p140 = pneg %p139
      $region22: #{tpu_custom_call.1} parent=5 // pred_check_branch
        %142 = sbr.rel (%p140) target = $region24
      $region23: #{tpu_custom_call.1} parent=5 // pred_region
        // Predicated region
        $region25: #{tpu_custom_call.1} parent=23 // pred_check
          %p143 = pneg %p36
        $region26: #{tpu_custom_call.1} parent=23 // pred_check_branch
          %145 = sbr.rel (%p143) target = $region28
        $region27: #{tpu_custom_call.1} parent=23 // pred_region
          %s146 = sand.u32 %s26, 1
          %s147 = scalar_lea.sflag [#allocation3], %s146
          %s148 = sand.u32 %s26, 1
          %s149 = smul.addr %s148, 8
          %s150 = scalar_lea.vmem [#allocation2], %s149
          %s152 = ssub.s32 128, 128
          %153 = vsyncadd %s147, %s152
          %s154 = smul.addr %s16, 128
          %s155 = scalar_lea.hbm %s0, %s154
          %s157 = sshll.u32 %s150, 4
          %s158 = int_to_ptr.vmem [resolvable:$true] %s157
          %160 = dma.hbm_to_vmem [thread:$0]  %s155, 128, %s158, %s147
        $region28: #{tpu_custom_call.1} parent=23 // pred_fallthru
          _
      $region24: #{tpu_custom_call.1} parent=5 // pred_fallthru
        _
      %p161 = scmp.le.s32.totalorder 1, %s16
      %p162 = scmp.lt.s32.totalorder %s16, 3
      %p163 = pnand %p161, %p162
      %p164 = pneg %p163
      // Predicated region
      $region29: #{tpu_custom_call.1} parent=5 // pred_check
        _
      $region30: #{tpu_custom_call.1} parent=5 // pred_check_branch
        %166 = sbr.rel (%p163) target = $region32
      $region31: #{tpu_custom_call.1} parent=5 // pred_region
        %s167 = ssub.s32 %s16, 1
        %s168 = sand.u32 %s29, 1
        %s169 = scalar_lea.sflag [#allocation3], %s168
        %s170 = sand.u32 %s29, 1
        %s171 = smul.addr %s170, 8
        %s172 = scalar_lea.vmem [#allocation2], %s171
        // Predicated region
        $region33: #{tpu_custom_call.1} parent=31 // pred_check
          %p173 = pneg %p42
        $region34: #{tpu_custom_call.1} parent=31 // pred_check_branch
          %175 = sbr.rel (%p173) target = $region36
        $region35: #{tpu_custom_call.1} parent=31 // pred_region
          %176 = dma.done %s169, 128
        $region36: #{tpu_custom_call.1} parent=31 // pred_fallthru
          _
        // Predicated region
        $region37: #{tpu_custom_call.1} parent=31 // pred_check
          %p177 = pneg %p63
        $region38: #{tpu_custom_call.1} parent=31 // pred_check_branch
          %179 = sbr.rel (%p177) target = $region40
        $region39: #{tpu_custom_call.1} parent=31 // pred_region
          %180 = dma.done [#allocation6], 128
        $region40: #{tpu_custom_call.1} parent=31 // pred_fallthru
          _
        %s181 = sand.u32 %s29, 1
        %s182 = scalar_lea.sflag [#allocation3], %s181
        %s183 = sand.u32 %s29, 1
        %s184 = smul.addr %s183, 8
        %s185 = scalar_lea.vmem [#allocation2], %s184
        %p186 = pneg %p42
        %p187 = pneg %p39
        %p188 = pneg %p63
        %p189 = pneg %p60
        %p190 = pneg %p84
        %p191 = pneg %p81
        %p192 = pneg %p110
        %p193 = pneg %p107
        %s194 = sand.u32 %s97, 1
        %s195 = scalar_lea.sflag [#allocation4], %s194
        %s196 = sand.u32 %s97, 1
        %s197 = smul.addr %s196, 8
        %s198 = scalar_lea.vmem [#allocation7], %s197
        %v199 = vld [vmem:[%s172] sm:$0xff]
        %v200 = vld [vmem:[#allocation5] sm:$0xff]
        %v201 = vadd.f32 %v199, %v200
        %v202 = vld [vmem:[%s2] sm:$0x1]
        %v203 = vld [vmem:[%s2 + $0x1] sm:$0x1]
        %v204 = vld [vmem:[%s2 + $0x2] sm:$0x1]
        %v205 = vld [vmem:[%s2 + $0x3] sm:$0x1]
        %vm206 = vcmask 516096
        %v207 = vsel %vm206, %v202, 0.0
        %v208 = vsel %vm206, %v203, 0.0
        %v209 = vadd.f32 %v207, %v208
        %v210 = vsel %vm206, %v204, 0.0
        %v211 = vadd.f32 %v209, %v210
        %v212 = vsel %vm206, %v205, 0.0
        %v213 = vadd.f32 %v211, %v212
        %214 = vadd.xlane.f32.xlu0 %v213
        %v215 = vpop.xlane.xlu0 %214
        %v216 = vrot.slane %v215, 4
        %v217 = vadd.f32 %v215, %v216
        %v218 = vrot.slane %v217, 2
        %v219 = vadd.f32 %v217, %v218
        %v220 = vrot.slane %v219, 1
        %v221 = vadd.f32 %v219, %v220
        %s222 = vtos %v221
        %v223 = vstv %s222
        %v224 = vadd.f32 %v201, %v223
        %225 = vst [vmem:[%s198] sm:$0xff] %v224
        %s226 = sand.u32 %s97, 1
        %s227 = scalar_lea.sflag [#allocation4], %s226
        %s228 = sand.u32 %s97, 1
        %s229 = smul.addr %s228, 8
        %s230 = scalar_lea.vmem [#allocation7], %s229
        // Predicated region
        $region41: #{tpu_custom_call.1} parent=31 // pred_check
          %p231 = pneg %p107
        $region42: #{tpu_custom_call.1} parent=31 // pred_check_branch
          %233 = sbr.rel (%p231) target = $region44
        $region43: #{tpu_custom_call.1} parent=31 // pred_region
          %s235 = ssub.s32 128, 128
          %236 = vsyncadd %s227, %s235
          %s237 = smul.addr %s21, 128
          %s238 = scalar_lea.hbm %s3, %s237
          %s240 = sshll.u32 %s230, 4
          %s241 = int_to_ptr.vmem [resolvable:$true] %s240
          %243 = dma.vmem_to_hbm [thread:$0]  %s241, 128, %s238, %s227
        $region44: #{tpu_custom_call.1} parent=31 // pred_fallthru
          _
      $region32: #{tpu_custom_call.1} parent=5 // pred_fallthru
        _
      %p244 = scmp.le.s32.totalorder 2, %s16
      // Predicated region
      $region45: #{tpu_custom_call.1} parent=5 // pred_check
        %p245 = pneg %p244
      $region46: #{tpu_custom_call.1} parent=5 // pred_check_branch
        %247 = sbr.rel (%p245) target = $region48
      $region47: #{tpu_custom_call.1} parent=5 // pred_region
        %s248 = ssub.s32 %s16, 2
        // Predicated region
        $region49: #{tpu_custom_call.1} parent=47 // pred_check
          %p249 = pneg %p113
        $region50: #{tpu_custom_call.1} parent=47 // pred_check_branch
          %251 = sbr.rel (%p249) target = $region52
        $region51: #{tpu_custom_call.1} parent=47 // pred_region
          %s252 = sand.u32 %s98, 1
          %s253 = scalar_lea.sflag [#allocation4], %s252
          %s254 = sand.u32 %s98, 1
          %s255 = smul.addr %s254, 8
          %s256 = scalar_lea.vmem [#allocation7], %s255
          %257 = dma.done %s253, 128
        $region52: #{tpu_custom_call.1} parent=47 // pred_fallthru
          _
      $region48: #{tpu_custom_call.1} parent=5 // pred_fallthru
        _
    $region6: #{tpu_custom_call.1} parent=1 // loop_footer
      %s20 = sadd.s32 1, %s16
    $region7: #{tpu_custom_call.1} parent=1 // loop_footer_branch
      %15 = sbr.rel target = $region3
    $region8: #{tpu_custom_call.1} parent=1 // loop_exit
      _
    %258 = vsyncpa [#allocation3], 1
    %s259 = scalar_lea.sflag [#allocation3], 1
    %260 = vsyncpa %s259, 1
    %261 = vsyncpa [#allocation6], 1
    %262 = vsyncpa [#allocation4], 1
    %s263 = scalar_lea.sflag [#allocation4], 1
    %264 = vsyncpa %s263, 1

// kernel: tpu_custom_call.1
$region0: #{tpu_custom_call.1}
  #allocation0 [shape = 'u32[]', space=smem, size = 0x4, offset = 0x4, fixed_abs, tag = 'smem constant byte address 0x4 - core index']
  #allocation1 [shape = 'u32[144,128]{1,0:T(1,128)}', space=vmem, size = 0x12000, scoped, tag = 'internal scratch']
  %s0 = inlined_call_operand.hbm [shape: f32[2,256,256], index: 0, kind: input, shape index: {}]
  %s1 = inlined_call_operand.vmem [shape: f32[1,256], index: 1, kind: input, shape index: {}]
  %s2 = inlined_call_operand.vmem [shape: f32[1,256], index: 2, kind: input, shape index: {}]
  %s3 = inlined_call_operand.vmem [shape: f32[1,256], index: 3, kind: input, shape index: {}]
  %s4 = inlined_call_operand.vmem [shape: f32[1,256], index: 4, kind: input, shape index: {}]
  %s5 = inlined_call_operand.vmem [shape: bf16[256,256], index: 5, kind: input, shape index: {}]
  %s6 = inlined_call_operand.vmem [shape: f32[256,1], index: 6, kind: input, shape index: {}]
  %s7 = inlined_call_operand.vmem [shape: bf16[256,256], index: 7, kind: input, shape index: {}]
  %s8 = inlined_call_operand.vmem [shape: f32[256,1], index: 8, kind: input, shape index: {}]
  %s9 = inlined_call_operand.hbm [shape: bf16[2,4,64,256], index: 9, kind: output, shape index: {0}]
  %s10 = inlined_call_operand.hbm [shape: bf16[2,4,64,256], index: 10, kind: output, shape index: {1}]
  %11 = xla_tuple %s9, %s10
  %s12 = sld [smem:[#allocation0]]
  $region81: #{tpu_custom_call.1} parent=0
    _
  %s14 = ssub.s32 1, %s12
  %s15 = scalar_select 0, %s14, %s12
  $region1: #{tpu_custom_call.1} parent=0
    #allocation2 [shape = 'u8[262144]{0}', space=vmem, size = 0x40000, scoped, tag = 'input window, operand 0']
    #allocation3 [shape = 's32[2]{0}', space=sflag, size = 0x8, scoped, tag = 'scoped memory for tpu_custom_call.1']
    #allocation4 [shape = 's32[2]{0}', space=sflag, size = 0x8, scoped, tag = 'scoped memory for tpu_custom_call.1']
    #allocation5 [shape = 'u8[131072]{0}', space=vmem, size = 0x20000, scoped, tag = 'output window, operand 0']
    #allocation6 [shape = 'u8[131072]{0}', space=vmem, size = 0x20000, scoped, tag = 'output window, operand 1']
    #allocation7 [shape = 's32[2]{0}', space=sflag, size = 0x8, scoped, tag = 'scoped memory for tpu_custom_call.1']
    %16 = vsyncpa [#allocation3], 0
    %s17 = scalar_lea.sflag [#allocation3], 1
    %18 = vsyncpa %s17, 0
    %19 = vsyncpa [#allocation4], 0
    %s20 = scalar_lea.sflag [#allocation4], 1
    %21 = vsyncpa %s20, 0
    %22 = vsyncpa [#allocation7], 0
    %s23 = scalar_lea.sflag [#allocation7], 1
    %24 = vsyncpa %s23, 0
    loop: start=0, step=1, limit=6
    $region2: #{tpu_custom_call.1} parent=1 // loop_pre_header
      _
    $region3: #{tpu_custom_call.1} parent=1 // loop_header
      %s26 = sphi 0, %s30
      %p27 = scmp.ge.s32.totalorder %s26, 6
      %s33 = sphi 0, %s45
      %s34 = sphi 0, %s41
      %s35 = sphi 0, %s33
      %s36 = sphi 0, %s34
      %s37 = sphi 0, %s35
      %s38 = sphi 0, %s36
      %s50 = sphi 0, %s52
      %s53 = sphi 0, %s50
      %s54 = sphi 0, %s53
      %s70 = sphi 0, %s54
      %s74 = sphi 0, %s74
      %s76 = sphi 0, %s74
      %s77 = sphi 0, %s76
      %s91 = sphi 0, %s77
      %s95 = sphi 0, %s95
      %s97 = sphi 0, %s95
      %s98 = sphi 0, %s97
      %s112 = sphi 0, %s98
      %s116 = sphi 0, %s116
      %s118 = sphi 0, %s116
      %s119 = sphi 0, %s118
      %s133 = sphi 0, %s119
      %s137 = sphi 0, %s137
      %s139 = sphi 0, %s137
      %s140 = sphi 0, %s139
      %s154 = sphi 0, %s140
      %s158 = sphi 0, %s158
      %s160 = sphi 0, %s158
      %s161 = sphi 0, %s160
      %s175 = sphi 0, %s161
      %s179 = sphi 0, %s179
      %s181 = sphi 0, %s179
      %s182 = sphi 0, %s181
      %s196 = sphi 0, %s182
      %s200 = sphi 0, %s200
      %s202 = sphi 0, %s200
      %s203 = sphi 0, %s202
      %s217 = sphi 0, %s203
      %s221 = sphi 0, %s221
      %s223 = sphi 0, %s221
      %s224 = sphi 0, %s223
      %s238 = sphi 0, %s224
      %s246 = sphi 0, %s248
      %s249 = sphi 0, %s246
      %s250 = sphi 0, %s249
      %s266 = sphi 0, %s250
      %s274 = sphi 0, %s276
      %s277 = sphi 0, %s274
      %s278 = sphi 0, %s277
      %s294 = sphi 0, %s278
    $region4: #{tpu_custom_call.1} parent=1 // loop_header_branch
      %29 = sbr.rel (%p27) target = $region8
    $region5: #{tpu_custom_call.1} parent=1 // loop_body
      %s31 = ssub.s32 %s26, 1
      %s32 = ssub.s32 %s26, 2
      %s39 = sadd.s32 1, %s34
      %p40 = scmp.ge.s32.totalorder %s39, 2
      %s41 = scalar_select %p40, 0, %s39
      %s42 = sadd.s32 1, %s33
      %s43 = scalar_select %p40, %s42, %s33
      %p44 = scmp.ge.s32.totalorder %s43, 2
      %s45 = scalar_select %p44, 0, %s43
      %s46 = ssub.s32 %s33, %s45
      %s47 = ssub.s32 %s34, %s41
      %s48 = sor.u32 %s46, %s47
      %p49 = scmp.eq.s32.totalorder %s48, 0
      %s51 = sadd.s32 %s50, 1
      %s52 = scalar_select %p49, %s50, %s51
      %p55 = pneg %p49
      %p56 = scmp.eq.s32.totalorder %s26, 3
      %p57 = por %p55, %p56
      %p58 = scmp.ne.s32.totalorder %s50, %s53
      %p59 = scmp.eq.s32.totalorder %s26, 0
      %p60 = por %p58, %p59
      %p61 = scmp.ne.s32.totalorder %s50, %s53
      %p62 = scmp.eq.s32.totalorder %s31, 3
      %p63 = por %p61, %p62
      %p64 = scmp.ne.s32.totalorder %s53, %s54
      %p65 = scmp.eq.s32.totalorder %s31, 0
      %p66 = por %p64, %p65
      %p67 = scmp.ne.s32.totalorder %s53, %s54
      %p68 = scmp.eq.s32.totalorder %s32, 3
      %p69 = por %p67, %p68
      %p71 = scmp.ne.s32.totalorder %s54, %s70
      %p72 = scmp.eq.s32.totalorder %s32, 0
      %p73 = por %p71, %p72
      %s75 = sadd.s32 %s74, 1
      %p78 = scmp.eq.s32.totalorder %s26, 3
      %p79 = scmp.ne.s32.totalorder %s74, %s76
      %p80 = scmp.eq.s32.totalorder %s26, 0
      %p81 = por %p79, %p80
      %p82 = scmp.ne.s32.totalorder %s74, %s76
      %p83 = scmp.eq.s32.totalorder %s31, 3
      %p84 = por %p82, %p83
      %p85 = scmp.ne.s32.totalorder %s76, %s77
      %p86 = scmp.eq.s32.totalorder %s31, 0
      %p87 = por %p85, %p86
      %p88 = scmp.ne.s32.totalorder %s76, %s77
      %p89 = scmp.eq.s32.totalorder %s32, 3
      %p90 = por %p88, %p89
      %p92 = scmp.ne.s32.totalorder %s77, %s91
      %p93 = scmp.eq.s32.totalorder %s32, 0
      %p94 = por %p92, %p93
      %s96 = sadd.s32 %s95, 1
      %p99 = scmp.eq.s32.totalorder %s26, 3
      %p100 = scmp.ne.s32.totalorder %s95, %s97
      %p101 = scmp.eq.s32.totalorder %s26, 0
      %p102 = por %p100, %p101
      %p103 = scmp.ne.s32.totalorder %s95, %s97
      %p104 = scmp.eq.s32.totalorder %s31, 3
      %p105 = por %p103, %p104
      %p106 = scmp.ne.s32.totalorder %s97, %s98
      %p107 = scmp.eq.s32.totalorder %s31, 0
      %p108 = por %p106, %p107
      %p109 = scmp.ne.s32.totalorder %s97, %s98
      %p110 = scmp.eq.s32.totalorder %s32, 3
      %p111 = por %p109, %p110
      %p113 = scmp.ne.s32.totalorder %s98, %s112
      %p114 = scmp.eq.s32.totalorder %s32, 0
      %p115 = por %p113, %p114
      %s117 = sadd.s32 %s116, 1
      %p120 = scmp.eq.s32.totalorder %s26, 3
      %p121 = scmp.ne.s32.totalorder %s116, %s118
      %p122 = scmp.eq.s32.totalorder %s26, 0
      %p123 = por %p121, %p122
      %p124 = scmp.ne.s32.totalorder %s116, %s118
      %p125 = scmp.eq.s32.totalorder %s31, 3
      %p126 = por %p124, %p125
      %p127 = scmp.ne.s32.totalorder %s118, %s119
      %p128 = scmp.eq.s32.totalorder %s31, 0
      %p129 = por %p127, %p128
      %p130 = scmp.ne.s32.totalorder %s118, %s119
      %p131 = scmp.eq.s32.totalorder %s32, 3
      %p132 = por %p130, %p131
      %p134 = scmp.ne.s32.totalorder %s119, %s133
      %p135 = scmp.eq.s32.totalorder %s32, 0
      %p136 = por %p134, %p135
      %s138 = sadd.s32 %s137, 1
      %p141 = scmp.eq.s32.totalorder %s26, 3
      %p142 = scmp.ne.s32.totalorder %s137, %s139
      %p143 = scmp.eq.s32.totalorder %s26, 0
      %p144 = por %p142, %p143
      %p145 = scmp.ne.s32.totalorder %s137, %s139
      %p146 = scmp.eq.s32.totalorder %s31, 3
      %p147 = por %p145, %p146
      %p148 = scmp.ne.s32.totalorder %s139, %s140
      %p149 = scmp.eq.s32.totalorder %s31, 0
      %p150 = por %p148, %p149
      %p151 = scmp.ne.s32.totalorder %s139, %s140
      %p152 = scmp.eq.s32.totalorder %s32, 3
      %p153 = por %p151, %p152
      %p155 = scmp.ne.s32.totalorder %s140, %s154
      %p156 = scmp.eq.s32.totalorder %s32, 0
      %p157 = por %p155, %p156
      %s159 = sadd.s32 %s158, 1
      %p162 = scmp.eq.s32.totalorder %s26, 3
      %p163 = scmp.ne.s32.totalorder %s158, %s160
      %p164 = scmp.eq.s32.totalorder %s26, 0
      %p165 = por %p163, %p164
      %p166 = scmp.ne.s32.totalorder %s158, %s160
      %p167 = scmp.eq.s32.totalorder %s31, 3
      %p168 = por %p166, %p167
      %p169 = scmp.ne.s32.totalorder %s160, %s161
      %p170 = scmp.eq.s32.totalorder %s31, 0
      %p171 = por %p169, %p170
      %p172 = scmp.ne.s32.totalorder %s160, %s161
      %p173 = scmp.eq.s32.totalorder %s32, 3
      %p174 = por %p172, %p173
      %p176 = scmp.ne.s32.totalorder %s161, %s175
      %p177 = scmp.eq.s32.totalorder %s32, 0
      %p178 = por %p176, %p177
      %s180 = sadd.s32 %s179, 1
      %p183 = scmp.eq.s32.totalorder %s26, 3
      %p184 = scmp.ne.s32.totalorder %s179, %s181
      %p185 = scmp.eq.s32.totalorder %s26, 0
      %p186 = por %p184, %p185
      %p187 = scmp.ne.s32.totalorder %s179, %s181
      %p188 = scmp.eq.s32.totalorder %s31, 3
      %p189 = por %p187, %p188
      %p190 = scmp.ne.s32.totalorder %s181, %s182
      %p191 = scmp.eq.s32.totalorder %s31, 0
      %p192 = por %p190, %p191
      %p193 = scmp.ne.s32.totalorder %s181, %s182
      %p194 = scmp.eq.s32.totalorder %s32, 3
      %p195 = por %p193, %p194
      %p197 = scmp.ne.s32.totalorder %s182, %s196
      %p198 = scmp.eq.s32.totalorder %s32, 0
      %p199 = por %p197, %p198
      %s201 = sadd.s32 %s200, 1
      %p204 = scmp.eq.s32.totalorder %s26, 3
      %p205 = scmp.ne.s32.totalorder %s200, %s202
      %p206 = scmp.eq.s32.totalorder %s26, 0
      %p207 = por %p205, %p206
      %p208 = scmp.ne.s32.totalorder %s200, %s202
      %p209 = scmp.eq.s32.totalorder %s31, 3
      %p210 = por %p208, %p209
      %p211 = scmp.ne.s32.totalorder %s202, %s203
      %p212 = scmp.eq.s32.totalorder %s31, 0
      %p213 = por %p211, %p212
      %p214 = scmp.ne.s32.totalorder %s202, %s203
      %p215 = scmp.eq.s32.totalorder %s32, 3
      %p216 = por %p214, %p215
      %p218 = scmp.ne.s32.totalorder %s203, %s217
      %p219 = scmp.eq.s32.totalorder %s32, 0
      %p220 = por %p218, %p219
      %s222 = sadd.s32 %s221, 1
      %p225 = scmp.eq.s32.totalorder %s26, 3
      %p226 = scmp.ne.s32.totalorder %s221, %s223
      %p227 = scmp.eq.s32.totalorder %s26, 0
      %p228 = por %p226, %p227
      %p229 = scmp.ne.s32.totalorder %s221, %s223
      %p230 = scmp.eq.s32.totalorder %s31, 3
      %p231 = por %p229, %p230
      %p232 = scmp.ne.s32.totalorder %s223, %s224
      %p233 = scmp.eq.s32.totalorder %s31, 0
      %p234 = por %p232, %p233
      %p235 = scmp.ne.s32.totalorder %s223, %s224
      %p236 = scmp.eq.s32.totalorder %s32, 3
      %p237 = por %p235, %p236
      %p239 = scmp.ne.s32.totalorder %s224, %s238
      %p240 = scmp.eq.s32.totalorder %s32, 0
      %p241 = por %p239, %p240
      %s242 = ssub.s32 %s33, %s45
      %s243 = ssub.s32 %s34, %s41
      %s244 = sor.u32 %s242, %s243
      %p245 = scmp.eq.s32.totalorder %s244, 0
      %s247 = sadd.s32 %s246, 1
      %s248 = scalar_select %p245, %s246, %s247
      %p251 = pneg %p245
      %p252 = scmp.eq.s32.totalorder %s26, 3
      %p253 = por %p251, %p252
      %p254 = scmp.ne.s32.totalorder %s246, %s249
      %p255 = scmp.eq.s32.totalorder %s26, 0
      %p256 = por %p254, %p255
      %p257 = scmp.ne.s32.totalorder %s246, %s249
      %p258 = scmp.eq.s32.totalorder %s31, 3
      %p259 = por %p257, %p258
      %p260 = scmp.ne.s32.totalorder %s249, %s250
      %p261 = scmp.eq.s32.totalorder %s31, 0
      %p262 = por %p260, %p261
      %p263 = scmp.ne.s32.totalorder %s249, %s250
      %p264 = scmp.eq.s32.totalorder %s32, 3
      %p265 = por %p263, %p264
      %p267 = scmp.ne.s32.totalorder %s250, %s266
      %p268 = scmp.eq.s32.totalorder %s32, 0
      %p269 = por %p267, %p268
      %s270 = ssub.s32 %s33, %s45
      %s271 = ssub.s32 %s34, %s41
      %s272 = sor.u32 %s270, %s271
      %p273 = scmp.eq.s32.totalorder %s272, 0
      %s275 = sadd.s32 %s274, 1
      %s276 = scalar_select %p273, %s274, %s275
      %p279 = pneg %p273
      %p280 = scmp.eq.s32.totalorder %s26, 3
      %p281 = por %p279, %p280
      %p282 = scmp.ne.s32.totalorder %s274, %s277
      %p283 = scmp.eq.s32.totalorder %s26, 0
      %p284 = por %p282, %p283
      %p285 = scmp.ne.s32.totalorder %s274, %s277
      %p286 = scmp.eq.s32.totalorder %s31, 3
      %p287 = por %p285, %p286
      %p288 = scmp.ne.s32.totalorder %s277, %s278
      %p289 = scmp.eq.s32.totalorder %s31, 0
      %p290 = por %p288, %p289
      %p291 = scmp.ne.s32.totalorder %s277, %s278
      %p292 = scmp.eq.s32.totalorder %s32, 3
      %p293 = por %p291, %p292
      %p295 = scmp.ne.s32.totalorder %s278, %s294
      %p296 = scmp.eq.s32.totalorder %s32, 0
      %p297 = por %p295, %p296
      %p298 = scmp.le.s32.totalorder 1, %s26
      %p299 = scmp.lt.s32.totalorder %s26, 5
      %p300 = pnand %p298, %p299
      %p301 = pneg %p300
      // Predicated region
      $region9: #{tpu_custom_call.1} parent=5 // pred_check
        _
      $region10: #{tpu_custom_call.1} parent=5 // pred_check_branch
        %303 = sbr.rel (%p300) target = $region12
      $region11: #{tpu_custom_call.1} parent=5 // pred_region
        %s304 = ssub.s32 %s26, 1
        // Predicated region
        $region13: #{tpu_custom_call.1} parent=11 // pred_check
          %p305 = pneg %p87
        $region14: #{tpu_custom_call.1} parent=11 // pred_check_branch
          %307 = sbr.rel (%p305) target = $region16
        $region15: #{tpu_custom_call.1} parent=11 // pred_region
          _
        $region16: #{tpu_custom_call.1} parent=11 // pred_fallthru
          _
        // Predicated region
        $region17: #{tpu_custom_call.1} parent=11 // pred_check
          %p308 = pneg %p108
        $region18: #{tpu_custom_call.1} parent=11 // pred_check_branch
          %310 = sbr.rel (%p308) target = $region20
        $region19: #{tpu_custom_call.1} parent=11 // pred_region
          _
        $region20: #{tpu_custom_call.1} parent=11 // pred_fallthru
          _
        // Predicated region
        $region21: #{tpu_custom_call.1} parent=11 // pred_check
          %p311 = pneg %p129
        $region22: #{tpu_custom_call.1} parent=11 // pred_check_branch
          %313 = sbr.rel (%p311) target = $region24
        $region23: #{tpu_custom_call.1} parent=11 // pred_region
          _
        $region24: #{tpu_custom_call.1} parent=11 // pred_fallthru
          _
        // Predicated region
        $region25: #{tpu_custom_call.1} parent=11 // pred_check
          %p314 = pneg %p150
        $region26: #{tpu_custom_call.1} parent=11 // pred_check_branch
          %316 = sbr.rel (%p314) target = $region28
        $region27: #{tpu_custom_call.1} parent=11 // pred_region
          _
        $region28: #{tpu_custom_call.1} parent=11 // pred_fallthru
          _
        // Predicated region
        $region29: #{tpu_custom_call.1} parent=11 // pred_check
          %p317 = pneg %p171
        $region30: #{tpu_custom_call.1} parent=11 // pred_check_branch
          %319 = sbr.rel (%p317) target = $region32
        $region31: #{tpu_custom_call.1} parent=11 // pred_region
          _
        $region32: #{tpu_custom_call.1} parent=11 // pred_fallthru
          _
        // Predicated region
        $region33: #{tpu_custom_call.1} parent=11 // pred_check
          %p320 = pneg %p192
        $region34: #{tpu_custom_call.1} parent=11 // pred_check_branch
          %322 = sbr.rel (%p320) target = $region36
        $region35: #{tpu_custom_call.1} parent=11 // pred_region
          _
        $region36: #{tpu_custom_call.1} parent=11 // pred_fallthru
          _
        // Predicated region
        $region37: #{tpu_custom_call.1} parent=11 // pred_check
          %p323 = pneg %p213
        $region38: #{tpu_custom_call.1} parent=11 // pred_check_branch
          %325 = sbr.rel (%p323) target = $region40
        $region39: #{tpu_custom_call.1} parent=11 // pred_region
          _
        $region40: #{tpu_custom_call.1} parent=11 // pred_fallthru
          _
        // Predicated region
        $region41: #{tpu_custom_call.1} parent=11 // pred_check
          %p326 = pneg %p234
        $region42: #{tpu_custom_call.1} parent=11 // pred_check_branch
          %328 = sbr.rel (%p326) target = $region44
        $region43: #{tpu_custom_call.1} parent=11 // pred_region
          _
        $region44: #{tpu_custom_call.1} parent=11 // pred_fallthru
          _
      $region12: #{tpu_custom_call.1} parent=5 // pred_fallthru
        _
      %p329 = scmp.lt.s32.totalorder %s26, 4
      // Predicated region
      $region45: #{tpu_custom_call.1} parent=5 // pred_check
        %p330 = pneg %p329
      $region46: #{tpu_custom_call.1} parent=5 // pred_check_branch
        %332 = sbr.rel (%p330) target = $region48
      $region47: #{tpu_custom_call.1} parent=5 // pred_region
        // Predicated region
        $region49: #{tpu_custom_call.1} parent=47 // pred_check
          %p333 = pneg %p60
        $region50: #{tpu_custom_call.1} parent=47 // pred_check_branch
          %335 = sbr.rel (%p333) target = $region52
        $region51: #{tpu_custom_call.1} parent=47 // pred_region
          %s336 = sand.u32 %s50, 1
          %s337 = scalar_lea.sflag [#allocation3], %s336
          %s338 = sand.u32 %s50, 1
          %s339 = smul.addr %s338, 256
          %s340 = scalar_lea.vmem [#allocation2], %s339
          %s341 = smul.u32 16, %s34
          %s343 = ssub.s32 4096, 4096
          %344 = vsyncadd %s337, %s343
          %s345 = smul.addr %s341, 2
          %s346 = smul.addr %s33, 64
          %s347 = sadd.s32 %s345, %s346
          %s348 = smul.addr %s347, 128
          %s349 = scalar_lea.hbm %s0, %s348
          %s350 = sshll.u32 %s340, 4
          %s351 = int_to_ptr.vmem [resolvable:$true] %s350
          %356 = dma.hbm_to_vmem [thread:$0]  %s349, 4096, %s351, %s337, 256, 256, 16
        $region52: #{tpu_custom_call.1} parent=47 // pred_fallthru
          _
      $region48: #{tpu_custom_call.1} parent=5 // pred_fallthru
        _
      %p357 = scmp.le.s32.totalorder 1, %s26
      %p358 = scmp.lt.s32.totalorder %s26, 5
      %p359 = pnand %p357, %p358
      %p360 = pneg %p359
      // Predicated region
      $region53: #{tpu_custom_call.1} parent=5 // pred_check
        _
      $region54: #{tpu_custom_call.1} parent=5 // pred_check_branch
        %362 = sbr.rel (%p359) target = $region56
      $region55: #{tpu_custom_call.1} parent=5 // pred_region
        %s363 = ssub.s32 %s26, 1
        %s364 = sand.u32 %s53, 1
        %s365 = scalar_lea.sflag [#allocation3], %s364
        %s366 = sand.u32 %s53, 1
        %s367 = smul.addr %s366, 256
        %s368 = scalar_lea.vmem [#allocation2], %s367
        // Predicated region
        $region57: #{tpu_custom_call.1} parent=55 // pred_check
          %p369 = pneg %p66
        $region58: #{tpu_custom_call.1} parent=55 // pred_check_branch
          %371 = sbr.rel (%p369) target = $region60
        $region59: #{tpu_custom_call.1} parent=55 // pred_region
          %372 = dma.done %s365, 4096
        $region60: #{tpu_custom_call.1} parent=55 // pred_fallthru
          _
        %s373 = sand.u32 %s53, 1
        %s374 = scalar_lea.sflag [#allocation3], %s373
        %s375 = sand.u32 %s53, 1
        %s376 = smul.addr %s375, 256
        %s377 = scalar_lea.vmem [#allocation2], %s376
        %p378 = pneg %p66
        %p379 = pneg %p63
        %p380 = pneg %p87
        %p381 = pneg %p84
        %p382 = pneg %p108
        %p383 = pneg %p105
        %p384 = pneg %p129
        %p385 = pneg %p126
        %p386 = pneg %p150
        %p387 = pneg %p147
        %p388 = pneg %p171
        %p389 = pneg %p168
        %p390 = pneg %p192
        %p391 = pneg %p189
        %p392 = pneg %p213
        %p393 = pneg %p210
        %p394 = pneg %p234
        %p395 = pneg %p231
        %p396 = pneg %p262
        %p397 = pneg %p259
        %s398 = sand.u32 %s249, 1
        %s399 = scalar_lea.sflag [#allocation4], %s398
        %s400 = sand.u32 %s249, 1
        %s401 = smul.addr %s400, 128
        %s402 = scalar_lea.vmem [#allocation5], %s401
        %p403 = pneg %p290
        %p404 = pneg %p287
        %s405 = sand.u32 %s277, 1
        %s406 = scalar_lea.sflag [#allocation7], %s405
        %s407 = sand.u32 %s277, 1
        %s408 = smul.addr %s407, 128
        %s409 = scalar_lea.vmem [#allocation6], %s408
        %s410 = smul.u32 16, %s36
        %v412 = vld [vmem:[%s368] sm:$0xff]
        %v413 = vld [vmem:[%s368 + $0x8] sm:$0xff]
        %v414 = vld [vmem:[%s368 + $0x10] sm:$0xff]
        %v415 = vld [vmem:[%s368 + $0x18] sm:$0xff]
        %v416 = vld [vmem:[%s368 + $0x20] sm:$0xff]
        %v417 = vld [vmem:[%s368 + $0x28] sm:$0xff]
        %v418 = vld [vmem:[%s368 + $0x30] sm:$0xff]
        %v419 = vld [vmem:[%s368 + $0x38] sm:$0xff]
        %v420 = vld [vmem:[%s368 + $0x40] sm:$0xff]
        %v421 = vld [vmem:[%s368 + $0x48] sm:$0xff]
        %v422 = vld [vmem:[%s368 + $0x50] sm:$0xff]
        %v423 = vld [vmem:[%s368 + $0x58] sm:$0xff]
        %v424 = vld [vmem:[%s368 + $0x60] sm:$0xff]
        %v425 = vld [vmem:[%s368 + $0x68] sm:$0xff]
        %v426 = vld [vmem:[%s368 + $0x70] sm:$0xff]
        %v427 = vld [vmem:[%s368 + $0x78] sm:$0xff]
        %v428 = vld [vmem:[%s368 + $0x80] sm:$0xff]
        %v429 = vld [vmem:[%s368 + $0x88] sm:$0xff]
        %v430 = vld [vmem:[%s368 + $0x90] sm:$0xff]
        %v431 = vld [vmem:[%s368 + $0x98] sm:$0xff]
        %v432 = vld [vmem:[%s368 + $0xa0] sm:$0xff]
        %v433 = vld [vmem:[%s368 + $0xa8] sm:$0xff]
        %v434 = vld [vmem:[%s368 + $0xb0] sm:$0xff]
        %v435 = vld [vmem:[%s368 + $0xb8] sm:$0xff]
        %v436 = vld [vmem:[%s368 + $0xc0] sm:$0xff]
        %v437 = vld [vmem:[%s368 + $0xc8] sm:$0xff]
        %v438 = vld [vmem:[%s368 + $0xd0] sm:$0xff]
        %v439 = vld [vmem:[%s368 + $0xd8] sm:$0xff]
        %v440 = vld [vmem:[%s368 + $0xe0] sm:$0xff]
        %v441 = vld [vmem:[%s368 + $0xe8] sm:$0xff]
        %v442 = vld [vmem:[%s368 + $0xf0] sm:$0xff]
        %v443 = vld [vmem:[%s368 + $0xf8] sm:$0xff]
        %v444 = vld [vmem:[%s1] sm:$0x3]
        %v445 = vld [vmem:[%s2] sm:$0x3]
        %v446 = vadd.f32 %v412, %v413
        %447 = vadd.xlane.f32.xlu0 %v446
        %v448 = vpop.xlane.xlu0 %447
        %v449 = vadd.f32 %v414, %v415
        %450 = vadd.xlane.f32.xlu0 %v449
        %v451 = vpop.xlane.xlu0 %450
        %v452 = vadd.f32 %v416, %v417
        %453 = vadd.xlane.f32.xlu0 %v452
        %v454 = vpop.xlane.xlu0 %453
        %v455 = vadd.f32 %v418, %v419
        %456 = vadd.xlane.f32.xlu0 %v455
        %v457 = vpop.xlane.xlu0 %456
        %v458 = vadd.f32 %v420, %v421
        %459 = vadd.xlane.f32.xlu0 %v458
        %v460 = vpop.xlane.xlu0 %459
        %v461 = vadd.f32 %v422, %v423
        %462 = vadd.xlane.f32.xlu0 %v461
        %v463 = vpop.xlane.xlu0 %462
        %v464 = vadd.f32 %v424, %v425
        %465 = vadd.xlane.f32.xlu0 %v464
        %v466 = vpop.xlane.xlu0 %465
        %v467 = vadd.f32 %v426, %v427
        %468 = vadd.xlane.f32.xlu0 %v467
        %v469 = vpop.xlane.xlu0 %468
        %v470 = vadd.f32 %v428, %v429
        %471 = vadd.xlane.f32.xlu0 %v470
        %v472 = vpop.xlane.xlu0 %471
        %v473 = vadd.f32 %v430, %v431
        %474 = vadd.xlane.f32.xlu0 %v473
        %v475 = vpop.xlane.xlu0 %474
        %v476 = vadd.f32 %v432, %v433
        %477 = vadd.xlane.f32.xlu0 %v476
        %v478 = vpop.xlane.xlu0 %477
        %v479 = vadd.f32 %v434, %v435
        %480 = vadd.xlane.f32.xlu0 %v479
        %v481 = vpop.xlane.xlu0 %480
        %v482 = vadd.f32 %v436, %v437
        %483 = vadd.xlane.f32.xlu0 %v482
        %v484 = vpop.xlane.xlu0 %483
        %v485 = vadd.f32 %v438, %v439
        %486 = vadd.xlane.f32.xlu0 %v485
        %v487 = vpop.xlane.xlu0 %486
        %v488 = vadd.f32 %v440, %v441
        %489 = vadd.xlane.f32.xlu0 %v488
        %v490 = vpop.xlane.xlu0 %489
        %v491 = vadd.f32 %v442, %v443
        %492 = vadd.xlane.f32.xlu0 %v491
        %v493 = vpop.xlane.xlu0 %492
        %v494 = vrcp.pop 256.0
        %v495 = vmul.f32 %v448, %v494
        %v496 = vmul.f32 %v451, %v494
        %v497 = vmul.f32 %v454, %v494
        %v498 = vmul.f32 %v457, %v494
        %v499 = vmul.f32 %v460, %v494
        %v500 = vmul.f32 %v463, %v494
        %v501 = vmul.f32 %v466, %v494
        %v502 = vmul.f32 %v469, %v494
        %v503 = vmul.f32 %v472, %v494
        %v504 = vmul.f32 %v475, %v494
        %v505 = vmul.f32 %v478, %v494
        %v506 = vmul.f32 %v481, %v494
        %v507 = vmul.f32 %v484, %v494
        %v508 = vmul.f32 %v487, %v494
        %v509 = vmul.f32 %v490, %v494
        %v510 = vmul.f32 %v493, %v494
        %v511 = vsub.f32 %v412, %v495
        %v512 = vsub.f32 %v413, %v495
        %v513 = vsub.f32 %v414, %v496
        %v514 = vsub.f32 %v415, %v496
        %v515 = vsub.f32 %v416, %v497
        %v516 = vsub.f32 %v417, %v497
        %v517 = vsub.f32 %v418, %v498
        %v518 = vsub.f32 %v419, %v498
        %v519 = vsub.f32 %v420, %v499
        %v520 = vsub.f32 %v421, %v499
        %v521 = vsub.f32 %v422, %v500
        %v522 = vsub.f32 %v423, %v500
        %v523 = vsub.f32 %v424, %v501
        %v524 = vsub.f32 %v425, %v501
        %v525 = vsub.f32 %v426, %v502
        %v526 = vsub.f32 %v427, %v502
        %v527 = vsub.f32 %v428, %v503
        %v528 = vsub.f32 %v429, %v503
        %v529 = vsub.f32 %v430, %v504
        %v530 = vsub.f32 %v431, %v504
        %v531 = vsub.f32 %v432, %v505
        %v532 = vsub.f32 %v433, %v505
        %v533 = vsub.f32 %v434, %v506
        %v534 = vsub.f32 %v435, %v506
        %v535 = vsub.f32 %v436, %v507
        %v536 = vsub.f32 %v437, %v507
        %v537 = vsub.f32 %v438, %v508
        %v538 = vsub.f32 %v439, %v508
        %v539 = vsub.f32 %v440, %v509
        %v540 = vsub.f32 %v441, %v509
        %v541 = vsub.f32 %v442, %v510
        %v542 = vsub.f32 %v443, %v510
        %v543 = vmul.f32 %v511, %v511
        %v544 = vmul.f32 %v512, %v512
        %v545 = vmul.f32 %v513, %v513
        %v546 = vmul.f32 %v514, %v514
        %v547 = vmul.f32 %v515, %v515
        %v548 = vmul.f32 %v516, %v516
        %v549 = vmul.f32 %v517, %v517
        %v550 = vmul.f32 %v518, %v518
        %v551 = vmul.f32 %v519, %v519
        %v552 = vmul.f32 %v520, %v520
        %v553 = vmul.f32 %v521, %v521
        %v554 = vmul.f32 %v522, %v522
        %v555 = vmul.f32 %v523, %v523
        %v556 = vmul.f32 %v524, %v524
        %v557 = vmul.f32 %v525, %v525
        %v558 = vmul.f32 %v526, %v526
        %v559 = vmul.f32 %v527, %v527
        %v560 = vmul.f32 %v528, %v528
        %v561 = vmul.f32 %v529, %v529
        %v562 = vmul.f32 %v530, %v530
        %v563 = vmul.f32 %v531, %v531
        %v564 = vmul.f32 %v532, %v532
        %v565 = vmul.f32 %v533, %v533
        %v566 = vmul.f32 %v534, %v534
        %v567 = vmul.f32 %v535, %v535
        %v568 = vmul.f32 %v536, %v536
        %v569 = vmul.f32 %v537, %v537
        %v570 = vmul.f32 %v538, %v538
        %v571 = vmul.f32 %v539, %v539
        %v572 = vmul.f32 %v540, %v540
        %v573 = vmul.f32 %v541, %v541
        %v574 = vmul.f32 %v542, %v542
        %v575 = vadd.f32 %v543, %v544
        %576 = vadd.xlane.f32.xlu0 %v575
        %v577 = vpop.xlane.xlu0 %576
        %v578 = vadd.f32 %v545, %v546
        %579 = vadd.xlane.f32.xlu0 %v578
        %v580 = vpop.xlane.xlu0 %579
        %v581 = vadd.f32 %v547, %v548
        %582 = vadd.xlane.f32.xlu0 %v581
        %v583 = vpop.xlane.xlu0 %582
        %v584 = vadd.f32 %v549, %v550
        %585 = vadd.xlane.f32.xlu0 %v584
        %v586 = vpop.xlane.xlu0 %585
        %v587 = vadd.f32 %v551, %v552
        %588 = vadd.xlane.f32.xlu0 %v587
        %v589 = vpop.xlane.xlu0 %588
        %v590 = vadd.f32 %v553, %v554
        %591 = vadd.xlane.f32.xlu0 %v590
        %v592 = vpop.xlane.xlu0 %591
        %v593 = vadd.f32 %v555, %v556
        %594 = vadd.xlane.f32.xlu0 %v593
        %v595 = vpop.xlane.xlu0 %594
        %v596 = vadd.f32 %v557, %v558
        %597 = vadd.xlane.f32.xlu0 %v596
        %v598 = vpop.xlane.xlu0 %597
        %v599 = vadd.f32 %v559, %v560
        %600 = vadd.xlane.f32.xlu0 %v599
        %v601 = vpop.xlane.xlu0 %600
        %v602 = vadd.f32 %v561, %v562
        %603 = vadd.xlane.f32.xlu0 %v602
        %v604 = vpop.xlane.xlu0 %603
        %v605 = vadd.f32 %v563, %v564
        %606 = vadd.xlane.f32.xlu0 %v605
        %v607 = vpop.xlane.xlu0 %606
        %v608 = vadd.f32 %v565, %v566
        %609 = vadd.xlane.f32.xlu0 %v608
        %v610 = vpop.xlane.xlu0 %609
        %v611 = vadd.f32 %v567, %v568
        %612 = vadd.xlane.f32.xlu0 %v611
        %v613 = vpop.xlane.xlu0 %612
        %v614 = vadd.f32 %v569, %v570
        %615 = vadd.xlane.f32.xlu0 %v614
        %v616 = vpop.xlane.xlu0 %615
        %v617 = vadd.f32 %v571, %v572
        %618 = vadd.xlane.f32.xlu0 %v617
        %v619 = vpop.xlane.xlu0 %618
        %v620 = vadd.f32 %v573, %v574
        %621 = vadd.xlane.f32.xlu0 %v620
        %v622 = vpop.xlane.xlu0 %621
        %v623 = vmul.f32 %v577, %v494
        %v624 = vmul.f32 %v580, %v494
        %v625 = vmul.f32 %v583, %v494
        %v626 = vmul.f32 %v586, %v494
        %v627 = vmul.f32 %v589, %v494
        %v628 = vmul.f32 %v592, %v494
        %v629 = vmul.f32 %v595, %v494
        %v630 = vmul.f32 %v598, %v494
        %v631 = vmul.f32 %v601, %v494
        %v632 = vmul.f32 %v604, %v494
        %v633 = vmul.f32 %v607, %v494
        %v634 = vmul.f32 %v610, %v494
        %v635 = vmul.f32 %v613, %v494
        %v636 = vmul.f32 %v616, %v494
        %v637 = vmul.f32 %v619, %v494
        %v638 = vmul.f32 %v622, %v494
        %v639 = vadd.f32 %v623, 1e-05
        %v640 = vadd.f32 %v624, 1e-05
        %v641 = vadd.f32 %v625, 1e-05
        %v642 = vadd.f32 %v626, 1e-05
        %v643 = vadd.f32 %v627, 1e-05
        %v644 = vadd.f32 %v628, 1e-05
        %v645 = vadd.f32 %v629, 1e-05
        %v646 = vadd.f32 %v630, 1e-05
        %v647 = vadd.f32 %v631, 1e-05
        %v648 = vadd.f32 %v632, 1e-05
        %v649 = vadd.f32 %v633, 1e-05
        %v650 = vadd.f32 %v634, 1e-05
        %v651 = vadd.f32 %v635, 1e-05
        %v652 = vadd.f32 %v636, 1e-05
        %v653 = vadd.f32 %v637, 1e-05
        %v654 = vadd.f32 %v638, 1e-05
        %v655 = vrsqrt.pop %v639
        %v656 = vrsqrt.pop %v640
        %v657 = vrsqrt.pop %v641
        %v658 = vrsqrt.pop %v642
        %v659 = vrsqrt.pop %v643
        %v660 = vrsqrt.pop %v644
        %v661 = vrsqrt.pop %v645
        %v662 = vrsqrt.pop %v646
        %v663 = vrsqrt.pop %v647
        %v664 = vrsqrt.pop %v648
        %v665 = vrsqrt.pop %v649
        %v666 = vrsqrt.pop %v650
        %v667 = vrsqrt.pop %v651
        %v668 = vrsqrt.pop %v652
        %v669 = vrsqrt.pop %v653
        %v670 = vrsqrt.pop %v654
        %v671 = vmul.f32 %v511, %v655
        %v672 = vmul.f32 %v512, %v655
        %v673 = vmul.f32 %v513, %v656
        %v674 = vmul.f32 %v514, %v656
        %v675 = vmul.f32 %v515, %v657
        %v676 = vmul.f32 %v516, %v657
        %v677 = vmul.f32 %v517, %v658
        %v678 = vmul.f32 %v518, %v658
        %v679 = vmul.f32 %v519, %v659
        %v680 = vmul.f32 %v520, %v659
        %v681 = vmul.f32 %v521, %v660
        %v682 = vmul.f32 %v522, %v660
        %v683 = vmul.f32 %v523, %v661
        %v684 = vmul.f32 %v524, %v661
        %v685 = vmul.f32 %v525, %v662
        %v686 = vmul.f32 %v526, %v662
        %v687 = vmul.f32 %v527, %v663
        %v688 = vmul.f32 %v528, %v663
        %v689 = vmul.f32 %v529, %v664
        %v690 = vmul.f32 %v530, %v664
        %v691 = vmul.f32 %v531, %v665
        %v692 = vmul.f32 %v532, %v665
        %v693 = vmul.f32 %v533, %v666
        %v694 = vmul.f32 %v534, %v666
        %v695 = vmul.f32 %v535, %v667
        %v696 = vmul.f32 %v536, %v667
        %v697 = vmul.f32 %v537, %v668
        %v698 = vmul.f32 %v538, %v668
        %v699 = vmul.f32 %v539, %v669
        %v700 = vmul.f32 %v540, %v669
        %v701 = vmul.f32 %v541, %v670
        %v702 = vmul.f32 %v542, %v670
        %v704 = vlaneseq
        %v705 = vshrl.u32 %v704, 7
        %v706 = vsub.s32 0, %v705
        %v707 = vrot.slane %v444, %v706
        %v708 = vlaneseq
        %v709 = vshrl.u32 %v708, 7
        %v710 = vsub.s32 1, %v709
        %v711 = vrot.slane %v444, %v710
        %v714 = vmul.f32 %v671, %v707
        %v715 = vmul.f32 %v672, %v711
        %v716 = vmul.f32 %v673, %v707
        %v717 = vmul.f32 %v674, %v711
        %v718 = vmul.f32 %v675, %v707
        %v719 = vmul.f32 %v676, %v711
        %v720 = vmul.f32 %v677, %v707
        %v721 = vmul.f32 %v678, %v711
        %v722 = vmul.f32 %v679, %v707
        %v723 = vmul.f32 %v680, %v711
        %v724 = vmul.f32 %v681, %v707
        %v725 = vmul.f32 %v682, %v711
        %v726 = vmul.f32 %v683, %v707
        %v727 = vmul.f32 %v684, %v711
        %v728 = vmul.f32 %v685, %v707
        %v729 = vmul.f32 %v686, %v711
        %v730 = vmul.f32 %v687, %v707
        %v731 = vmul.f32 %v688, %v711
        %v732 = vmul.f32 %v689, %v707
        %v733 = vmul.f32 %v690, %v711
        %v734 = vmul.f32 %v691, %v707
        %v735 = vmul.f32 %v692, %v711
        %v736 = vmul.f32 %v693, %v707
        %v737 = vmul.f32 %v694, %v711
        %v738 = vmul.f32 %v695, %v707
        %v739 = vmul.f32 %v696, %v711
        %v740 = vmul.f32 %v697, %v707
        %v741 = vmul.f32 %v698, %v711
        %v742 = vmul.f32 %v699, %v707
        %v743 = vmul.f32 %v700, %v711
        %v744 = vmul.f32 %v701, %v707
        %v745 = vmul.f32 %v702, %v711
        %v747 = vlaneseq
        %v748 = vshrl.u32 %v747, 7
        %v749 = vsub.s32 0, %v748
        %v750 = vrot.slane %v445, %v749
        %v751 = vlaneseq
        %v752 = vshrl.u32 %v751, 7
        %v753 = vsub.s32 1, %v752
        %v754 = vrot.slane %v445, %v753
        %v757 = vadd.f32 %v714, %v750
        %v758 = vadd.f32 %v715, %v754
        %v759 = vadd.f32 %v716, %v750
        %v760 = vadd.f32 %v717, %v754
        %v761 = vadd.f32 %v718, %v750
        %v762 = vadd.f32 %v719, %v754
        %v763 = vadd.f32 %v720, %v750
        %v764 = vadd.f32 %v721, %v754
        %v765 = vadd.f32 %v722, %v750
        %v766 = vadd.f32 %v723, %v754
        %v767 = vadd.f32 %v724, %v750
        %v768 = vadd.f32 %v725, %v754
        %v769 = vadd.f32 %v726, %v750
        %v770 = vadd.f32 %v727, %v754
        %v771 = vadd.f32 %v728, %v750
        %v772 = vadd.f32 %v729, %v754
        %v773 = vadd.f32 %v730, %v750
        %v774 = vadd.f32 %v731, %v754
        %v775 = vadd.f32 %v732, %v750
        %v776 = vadd.f32 %v733, %v754
        %v777 = vadd.f32 %v734, %v750
        %v778 = vadd.f32 %v735, %v754
        %v779 = vadd.f32 %v736, %v750
        %v780 = vadd.f32 %v737, %v754
        %v781 = vadd.f32 %v738, %v750
        %v782 = vadd.f32 %v739, %v754
        %v783 = vadd.f32 %v740, %v750
        %v784 = vadd.f32 %v741, %v754
        %v785 = vadd.f32 %v742, %v750
        %v786 = vadd.f32 %v743, %v754
        %v787 = vadd.f32 %v744, %v750
        %v788 = vadd.f32 %v745, %v754
        %v789 = vld [vmem:[%s3] sm:$0x3]
        %v790 = vld [vmem:[%s4] sm:$0x3]
        %v791 = vadd.f32 %v757, %v758
        %792 = vadd.xlane.f32.xlu0 %v791
        %v793 = vpop.xlane.xlu0 %792
        %v794 = vadd.f32 %v759, %v760
        %795 = vadd.xlane.f32.xlu0 %v794
        %v796 = vpop.xlane.xlu0 %795
        %v797 = vadd.f32 %v761, %v762
        %798 = vadd.xlane.f32.xlu0 %v797
        %v799 = vpop.xlane.xlu0 %798
        %v800 = vadd.f32 %v763, %v764
        %801 = vadd.xlane.f32.xlu0 %v800
        %v802 = vpop.xlane.xlu0 %801
        %v803 = vadd.f32 %v765, %v766
        %804 = vadd.xlane.f32.xlu0 %v803
        %v805 = vpop.xlane.xlu0 %804
        %v806 = vadd.f32 %v767, %v768
        %807 = vadd.xlane.f32.xlu0 %v806
        %v808 = vpop.xlane.xlu0 %807
        %v809 = vadd.f32 %v769, %v770
        %810 = vadd.xlane.f32.xlu0 %v809
        %v811 = vpop.xlane.xlu0 %810
        %v812 = vadd.f32 %v771, %v772
        %813 = vadd.xlane.f32.xlu0 %v812
        %v814 = vpop.xlane.xlu0 %813
        %v815 = vadd.f32 %v773, %v774
        %816 = vadd.xlane.f32.xlu0 %v815
        %v817 = vpop.xlane.xlu0 %816
        %v818 = vadd.f32 %v775, %v776
        %819 = vadd.xlane.f32.xlu0 %v818
        %v820 = vpop.xlane.xlu0 %819
        %v821 = vadd.f32 %v777, %v778
        %822 = vadd.xlane.f32.xlu0 %v821
        %v823 = vpop.xlane.xlu0 %822
        %v824 = vadd.f32 %v779, %v780
        %825 = vadd.xlane.f32.xlu0 %v824
        %v826 = vpop.xlane.xlu0 %825
        %v827 = vadd.f32 %v781, %v782
        %828 = vadd.xlane.f32.xlu0 %v827
        %v829 = vpop.xlane.xlu0 %828
        %v830 = vadd.f32 %v783, %v784
        %831 = vadd.xlane.f32.xlu0 %v830
        %v832 = vpop.xlane.xlu0 %831
        %v833 = vadd.f32 %v785, %v786
        %834 = vadd.xlane.f32.xlu0 %v833
        %v835 = vpop.xlane.xlu0 %834
        %v836 = vadd.f32 %v787, %v788
        %837 = vadd.xlane.f32.xlu0 %v836
        %v838 = vpop.xlane.xlu0 %837
        %v839 = vmul.f32 %v793, %v494
        %v840 = vmul.f32 %v796, %v494
        %v841 = vmul.f32 %v799, %v494
        %v842 = vmul.f32 %v802, %v494
        %v843 = vmul.f32 %v805, %v494
        %v844 = vmul.f32 %v808, %v494
        %v845 = vmul.f32 %v811, %v494
        %v846 = vmul.f32 %v814, %v494
        %v847 = vmul.f32 %v817, %v494
        %v848 = vmul.f32 %v820, %v494
        %v849 = vmul.f32 %v823, %v494
        %v850 = vmul.f32 %v826, %v494
        %v851 = vmul.f32 %v829, %v494
        %v852 = vmul.f32 %v832, %v494
        %v853 = vmul.f32 %v835, %v494
        %v854 = vmul.f32 %v838, %v494
        %v855 = vsub.f32 %v757, %v839
        %v856 = vsub.f32 %v758, %v839
        %v857 = vsub.f32 %v759, %v840
        %v858 = vsub.f32 %v760, %v840
        %v859 = vsub.f32 %v761, %v841
        %v860 = vsub.f32 %v762, %v841
        %v861 = vsub.f32 %v763, %v842
        %v862 = vsub.f32 %v764, %v842
        %v863 = vsub.f32 %v765, %v843
        %v864 = vsub.f32 %v766, %v843
        %v865 = vsub.f32 %v767, %v844
        %v866 = vsub.f32 %v768, %v844
        %v867 = vsub.f32 %v769, %v845
        %v868 = vsub.f32 %v770, %v845
        %v869 = vsub.f32 %v771, %v846
        %v870 = vsub.f32 %v772, %v846
        %v871 = vsub.f32 %v773, %v847
        %v872 = vsub.f32 %v774, %v847
        %v873 = vsub.f32 %v775, %v848
        %v874 = vsub.f32 %v776, %v848
        %v875 = vsub.f32 %v777, %v849
        %v876 = vsub.f32 %v778, %v849
        %v877 = vsub.f32 %v779, %v850
        %v878 = vsub.f32 %v780, %v850
        %v879 = vsub.f32 %v781, %v851
        %v880 = vsub.f32 %v782, %v851
        %v881 = vsub.f32 %v783, %v852
        %v882 = vsub.f32 %v784, %v852
        %v883 = vsub.f32 %v785, %v853
        %v884 = vsub.f32 %v786, %v853
        %v885 = vsub.f32 %v787, %v854
        %v886 = vsub.f32 %v788, %v854
        %v887 = vmul.f32 %v855, %v855
        %v888 = vmul.f32 %v856, %v856
        %v889 = vmul.f32 %v857, %v857
        %v890 = vmul.f32 %v858, %v858
        %v891 = vmul.f32 %v859, %v859
        %v892 = vmul.f32 %v860, %v860
        %v893 = vmul.f32 %v861, %v861
        %v894 = vmul.f32 %v862, %v862
        %v895 = vmul.f32 %v863, %v863
        %v896 = vmul.f32 %v864, %v864
        %v897 = vmul.f32 %v865, %v865
        %v898 = vmul.f32 %v866, %v866
        %v899 = vmul.f32 %v867, %v867
        %v900 = vmul.f32 %v868, %v868
        %v901 = vmul.f32 %v869, %v869
        %v902 = vmul.f32 %v870, %v870
        %v903 = vmul.f32 %v871, %v871
        %v904 = vmul.f32 %v872, %v872
        %v905 = vmul.f32 %v873, %v873
        %v906 = vmul.f32 %v874, %v874
        %v907 = vmul.f32 %v875, %v875
        %v908 = vmul.f32 %v876, %v876
        %v909 = vmul.f32 %v877, %v877
        %v910 = vmul.f32 %v878, %v878
        %v911 = vmul.f32 %v879, %v879
        %v912 = vmul.f32 %v880, %v880
        %v913 = vmul.f32 %v881, %v881
        %v914 = vmul.f32 %v882, %v882
        %v915 = vmul.f32 %v883, %v883
        %v916 = vmul.f32 %v884, %v884
        %v917 = vmul.f32 %v885, %v885
        %v918 = vmul.f32 %v886, %v886
        %v919 = vadd.f32 %v887, %v888
        %920 = vadd.xlane.f32.xlu0 %v919
        %v921 = vpop.xlane.xlu0 %920
        %v922 = vadd.f32 %v889, %v890
        %923 = vadd.xlane.f32.xlu0 %v922
        %v924 = vpop.xlane.xlu0 %923
        %v925 = vadd.f32 %v891, %v892
        %926 = vadd.xlane.f32.xlu0 %v925
        %v927 = vpop.xlane.xlu0 %926
        %v928 = vadd.f32 %v893, %v894
        %929 = vadd.xlane.f32.xlu0 %v928
        %v930 = vpop.xlane.xlu0 %929
        %v931 = vadd.f32 %v895, %v896
        %932 = vadd.xlane.f32.xlu0 %v931
        %v933 = vpop.xlane.xlu0 %932
        %v934 = vadd.f32 %v897, %v898
        %935 = vadd.xlane.f32.xlu0 %v934
        %v936 = vpop.xlane.xlu0 %935
        %v937 = vadd.f32 %v899, %v900
        %938 = vadd.xlane.f32.xlu0 %v937
        %v939 = vpop.xlane.xlu0 %938
        %v940 = vadd.f32 %v901, %v902
        %941 = vadd.xlane.f32.xlu0 %v940
        %v942 = vpop.xlane.xlu0 %941
        %v943 = vadd.f32 %v903, %v904
        %944 = vadd.xlane.f32.xlu0 %v943
        %v945 = vpop.xlane.xlu0 %944
        %v946 = vadd.f32 %v905, %v906
        %947 = vadd.xlane.f32.xlu0 %v946
        %v948 = vpop.xlane.xlu0 %947
        %v949 = vadd.f32 %v907, %v908
        %950 = vadd.xlane.f32.xlu0 %v949
        %v951 = vpop.xlane.xlu0 %950
        %v952 = vadd.f32 %v909, %v910
        %953 = vadd.xlane.f32.xlu0 %v952
        %v954 = vpop.xlane.xlu0 %953
        %v955 = vadd.f32 %v911, %v912
        %956 = vadd.xlane.f32.xlu0 %v955
        %v957 = vpop.xlane.xlu0 %956
        %v958 = vadd.f32 %v913, %v914
        %959 = vadd.xlane.f32.xlu0 %v958
        %v960 = vpop.xlane.xlu0 %959
        %v961 = vadd.f32 %v915, %v916
        %962 = vadd.xlane.f32.xlu0 %v961
        %v963 = vpop.xlane.xlu0 %962
        %v964 = vadd.f32 %v917, %v918
        %965 = vadd.xlane.f32.xlu0 %v964
        %v966 = vpop.xlane.xlu0 %965
        %v967 = vmul.f32 %v921, %v494
        %v968 = vmul.f32 %v924, %v494
        %v969 = vmul.f32 %v927, %v494
        %v970 = vmul.f32 %v930, %v494
        %v971 = vmul.f32 %v933, %v494
        %v972 = vmul.f32 %v936, %v494
        %v973 = vmul.f32 %v939, %v494
        %v974 = vmul.f32 %v942, %v494
        %v975 = vmul.f32 %v945, %v494
        %v976 = vmul.f32 %v948, %v494
        %v977 = vmul.f32 %v951, %v494
        %v978 = vmul.f32 %v954, %v494
        %v979 = vmul.f32 %v957, %v494
        %v980 = vmul.f32 %v960, %v494
        %v981 = vmul.f32 %v963, %v494
        %v982 = vmul.f32 %v966, %v494
        %v983 = vadd.f32 %v967, 1e-05
        %v984 = vadd.f32 %v968, 1e-05
        %v985 = vadd.f32 %v969, 1e-05
        %v986 = vadd.f32 %v970, 1e-05
        %v987 = vadd.f32 %v971, 1e-05
        %v988 = vadd.f32 %v972, 1e-05
        %v989 = vadd.f32 %v973, 1e-05
        %v990 = vadd.f32 %v974, 1e-05
        %v991 = vadd.f32 %v975, 1e-05
        %v992 = vadd.f32 %v976, 1e-05
        %v993 = vadd.f32 %v977, 1e-05
        %v994 = vadd.f32 %v978, 1e-05
        %v995 = vadd.f32 %v979, 1e-05
        %v996 = vadd.f32 %v980, 1e-05
        %v997 = vadd.f32 %v981, 1e-05
        %v998 = vadd.f32 %v982, 1e-05
        %v999 = vrsqrt.pop %v983
        %v1000 = vrsqrt.pop %v984
        %v1001 = vrsqrt.pop %v985
        %v1002 = vrsqrt.pop %v986
        %v1003 = vrsqrt.pop %v987
        %v1004 = vrsqrt.pop %v988
        %v1005 = vrsqrt.pop %v989
        %v1006 = vrsqrt.pop %v990
        %v1007 = vrsqrt.pop %v991
        %v1008 = vrsqrt.pop %v992
        %v1009 = vrsqrt.pop %v993
        %v1010 = vrsqrt.pop %v994
        %v1011 = vrsqrt.pop %v995
        %v1012 = vrsqrt.pop %v996
        %v1013 = vrsqrt.pop %v997
        %v1014 = vrsqrt.pop %v998
        %v1015 = vmul.f32 %v855, %v999
        %v1016 = vmul.f32 %v856, %v999
        %v1017 = vmul.f32 %v857, %v1000
        %v1018 = vmul.f32 %v858, %v1000
        %v1019 = vmul.f32 %v859, %v1001
        %v1020 = vmul.f32 %v860, %v1001
        %v1021 = vmul.f32 %v861, %v1002
        %v1022 = vmul.f32 %v862, %v1002
        %v1023 = vmul.f32 %v863, %v1003
        %v1024 = vmul.f32 %v864, %v1003
        %v1025 = vmul.f32 %v865, %v1004
        %v1026 = vmul.f32 %v866, %v1004
        %v1027 = vmul.f32 %v867, %v1005
        %v1028 = vmul.f32 %v868, %v1005
        %v1029 = vmul.f32 %v869, %v1006
        %v1030 = vmul.f32 %v870, %v1006
        %v1031 = vmul.f32 %v871, %v1007
        %v1032 = vmul.f32 %v872, %v1007
        %v1033 = vmul.f32 %v873, %v1008
        %v1034 = vmul.f32 %v874, %v1008
        %v1035 = vmul.f32 %v875, %v1009
        %v1036 = vmul.f32 %v876, %v1009
        %v1037 = vmul.f32 %v877, %v1010
        %v1038 = vmul.f32 %v878, %v1010
        %v1039 = vmul.f32 %v879, %v1011
        %v1040 = vmul.f32 %v880, %v1011
        %v1041 = vmul.f32 %v881, %v1012
        %v1042 = vmul.f32 %v882, %v1012
        %v1043 = vmul.f32 %v883, %v1013
        %v1044 = vmul.f32 %v884, %v1013
        %v1045 = vmul.f32 %v885, %v1014
        %v1046 = vmul.f32 %v886, %v1014
        %v1048 = vlaneseq
        %v1049 = vshrl.u32 %v1048, 7
        %v1050 = vsub.s32 0, %v1049
        %v1051 = vrot.slane %v789, %v1050
        %v1052 = vlaneseq
        %v1053 = vshrl.u32 %v1052, 7
        %v1054 = vsub.s32 1, %v1053
        %v1055 = vrot.slane %v789, %v1054
        %v1058 = vmul.f32 %v1015, %v1051
        %v1059 = vmul.f32 %v1016, %v1055
        %v1060 = vmul.f32 %v1017, %v1051
        %v1061 = vmul.f32 %v1018, %v1055
        %v1062 = vmul.f32 %v1019, %v1051
        %v1063 = vmul.f32 %v1020, %v1055
        %v1064 = vmul.f32 %v1021, %v1051
        %v1065 = vmul.f32 %v1022, %v1055
        %v1066 = vmul.f32 %v1023, %v1051
        %v1067 = vmul.f32 %v1024, %v1055
        %v1068 = vmul.f32 %v1025, %v1051
        %v1069 = vmul.f32 %v1026, %v1055
        %v1070 = vmul.f32 %v1027, %v1051
        %v1071 = vmul.f32 %v1028, %v1055
        %v1072 = vmul.f32 %v1029, %v1051
        %v1073 = vmul.f32 %v1030, %v1055
        %v1074 = vmul.f32 %v1031, %v1051
        %v1075 = vmul.f32 %v1032, %v1055
        %v1076 = vmul.f32 %v1033, %v1051
        %v1077 = vmul.f32 %v1034, %v1055
        %v1078 = vmul.f32 %v1035, %v1051
        %v1079 = vmul.f32 %v1036, %v1055
        %v1080 = vmul.f32 %v1037, %v1051
        %v1081 = vmul.f32 %v1038, %v1055
        %v1082 = vmul.f32 %v1039, %v1051
        %v1083 = vmul.f32 %v1040, %v1055
        %v1084 = vmul.f32 %v1041, %v1051
        %v1085 = vmul.f32 %v1042, %v1055
        %v1086 = vmul.f32 %v1043, %v1051
        %v1087 = vmul.f32 %v1044, %v1055
        %v1088 = vmul.f32 %v1045, %v1051
        %v1089 = vmul.f32 %v1046, %v1055
        %v1091 = vlaneseq
        %v1092 = vshrl.u32 %v1091, 7
        %v1093 = vsub.s32 0, %v1092
        %v1094 = vrot.slane %v790, %v1093
        %v1095 = vlaneseq
        %v1096 = vshrl.u32 %v1095, 7
        %v1097 = vsub.s32 1, %v1096
        %v1098 = vrot.slane %v790, %v1097
        %v1101 = vadd.f32 %v1058, %v1094
        %v1102 = vadd.f32 %v1059, %v1098
        %v1103 = vadd.f32 %v1060, %v1094
        %v1104 = vadd.f32 %v1061, %v1098
        %v1105 = vadd.f32 %v1062, %v1094
        %v1106 = vadd.f32 %v1063, %v1098
        %v1107 = vadd.f32 %v1064, %v1094
        %v1108 = vadd.f32 %v1065, %v1098
        %v1109 = vadd.f32 %v1066, %v1094
        %v1110 = vadd.f32 %v1067, %v1098
        %v1111 = vadd.f32 %v1068, %v1094
        %v1112 = vadd.f32 %v1069, %v1098
        %v1113 = vadd.f32 %v1070, %v1094
        %v1114 = vadd.f32 %v1071, %v1098
        %v1115 = vadd.f32 %v1072, %v1094
        %v1116 = vadd.f32 %v1073, %v1098
        %v1117 = vadd.f32 %v1074, %v1094
        %v1118 = vadd.f32 %v1075, %v1098
        %v1119 = vadd.f32 %v1076, %v1094
        %v1120 = vadd.f32 %v1077, %v1098
        %v1121 = vadd.f32 %v1078, %v1094
        %v1122 = vadd.f32 %v1079, %v1098
        %v1123 = vadd.f32 %v1080, %v1094
        %v1124 = vadd.f32 %v1081, %v1098
        %v1125 = vadd.f32 %v1082, %v1094
        %v1126 = vadd.f32 %v1083, %v1098
        %v1127 = vadd.f32 %v1084, %v1094
        %v1128 = vadd.f32 %v1085, %v1098
        %v1129 = vadd.f32 %v1086, %v1094
        %v1130 = vadd.f32 %v1087, %v1098
        %v1131 = vadd.f32 %v1088, %v1094
        %v1132 = vadd.f32 %v1089, %v1098
        %v1133 = vpack.c.bf16 %v1103, %v1101
        %v1134 = vpack.c.bf16 %v1104, %v1102
        %v1135 = vpack.c.bf16 %v1107, %v1105
        %v1136 = vpack.c.bf16 %v1108, %v1106
        %v1137 = vpack.c.bf16 %v1111, %v1109
        %v1138 = vpack.c.bf16 %v1112, %v1110
        %v1139 = vpack.c.bf16 %v1115, %v1113
        %v1140 = vpack.c.bf16 %v1116, %v1114
        %v1141 = vpack.c.bf16 %v1119, %v1117
        %v1142 = vpack.c.bf16 %v1120, %v1118
        %v1143 = vpack.c.bf16 %v1123, %v1121
        %v1144 = vpack.c.bf16 %v1124, %v1122
        %v1145 = vpack.c.bf16 %v1127, %v1125
        %v1146 = vpack.c.bf16 %v1128, %v1126
        %v1147 = vpack.c.bf16 %v1131, %v1129
        %v1148 = vpack.c.bf16 %v1132, %v1130
        %v1149 = vld [vmem:[%s5] sm:$0xff]
        %v1150 = vld [vmem:[%s5 + $0x8] sm:$0xff]
        %v1151 = vld [vmem:[%s5 + $0x10] sm:$0xff]
        %v1152 = vld [vmem:[%s5 + $0x18] sm:$0xff]
        %v1153 = vld [vmem:[%s5 + $0x20] sm:$0xff]
        %v1154 = vld [vmem:[%s5 + $0x28] sm:$0xff]
        %v1155 = vld [vmem:[%s5 + $0x30] sm:$0xff]
        %v1156 = vld [vmem:[%s5 + $0x38] sm:$0xff]
        %v1157 = vld [vmem:[%s5 + $0x40] sm:$0xff]
        %v1158 = vld [vmem:[%s5 + $0x48] sm:$0xff]
        %v1159 = vld [vmem:[%s5 + $0x50] sm:$0xff]
        %v1160 = vld [vmem:[%s5 + $0x58] sm:$0xff]
        %v1161 = vld [vmem:[%s5 + $0x60] sm:$0xff]
        %v1162 = vld [vmem:[%s5 + $0x68] sm:$0xff]
        %v1163 = vld [vmem:[%s5 + $0x70] sm:$0xff]
        %v1164 = vld [vmem:[%s5 + $0x78] sm:$0xff]
        %v1165 = vld [vmem:[%s5 + $0x80] sm:$0xff]
        %v1166 = vld [vmem:[%s5 + $0x88] sm:$0xff]
        %v1167 = vld [vmem:[%s5 + $0x90] sm:$0xff]
        %v1168 = vld [vmem:[%s5 + $0x98] sm:$0xff]
        %v1169 = vld [vmem:[%s5 + $0xa0] sm:$0xff]
        %v1170 = vld [vmem:[%s5 + $0xa8] sm:$0xff]
        %v1171 = vld [vmem:[%s5 + $0xb0] sm:$0xff]
        %v1172 = vld [vmem:[%s5 + $0xb8] sm:$0xff]
        %v1173 = vld [vmem:[%s5 + $0xc0] sm:$0xff]
        %v1174 = vld [vmem:[%s5 + $0xc8] sm:$0xff]
        %v1175 = vld [vmem:[%s5 + $0xd0] sm:$0xff]
        %v1176 = vld [vmem:[%s5 + $0xd8] sm:$0xff]
        %v1177 = vld [vmem:[%s5 + $0xe0] sm:$0xff]
        %v1178 = vld [vmem:[%s5 + $0xe8] sm:$0xff]
        %v1179 = vld [vmem:[%s5 + $0xf0] sm:$0xff]
        %v1180 = vld [vmem:[%s5 + $0xf8] sm:$0xff]
        %v1181 = vld [vmem:[%s6] sm:$0xff]
        %v1182 = vld [vmem:[%s6 + $0x8] sm:$0xff]
        %v1183 = vld [vmem:[%s6 + $0x10] sm:$0xff]
        %v1184 = vld [vmem:[%s6 + $0x18] sm:$0xff]
        %v1185 = vld [vmem:[%s6 + $0x20] sm:$0xff]
        %v1186 = vld [vmem:[%s6 + $0x28] sm:$0xff]
        %v1187 = vld [vmem:[%s6 + $0x30] sm:$0xff]
        %v1188 = vld [vmem:[%s6 + $0x38] sm:$0xff]
        %v1189 = vld [vmem:[%s6 + $0x40] sm:$0xff]
        %v1190 = vld [vmem:[%s6 + $0x48] sm:$0xff]
        %v1191 = vld [vmem:[%s6 + $0x50] sm:$0xff]
        %v1192 = vld [vmem:[%s6 + $0x58] sm:$0xff]
        %v1193 = vld [vmem:[%s6 + $0x60] sm:$0xff]
        %v1194 = vld [vmem:[%s6 + $0x68] sm:$0xff]
        %v1195 = vld [vmem:[%s6 + $0x70] sm:$0xff]
        %v1196 = vld [vmem:[%s6 + $0x78] sm:$0xff]
        %v1197 = vld [vmem:[%s6 + $0x80] sm:$0xff]
        %v1198 = vld [vmem:[%s6 + $0x88] sm:$0xff]
        %v1199 = vld [vmem:[%s6 + $0x90] sm:$0xff]
        %v1200 = vld [vmem:[%s6 + $0x98] sm:$0xff]
        %v1201 = vld [vmem:[%s6 + $0xa0] sm:$0xff]
        %v1202 = vld [vmem:[%s6 + $0xa8] sm:$0xff]
        %v1203 = vld [vmem:[%s6 + $0xb0] sm:$0xff]
        %v1204 = vld [vmem:[%s6 + $0xb8] sm:$0xff]
        %v1205 = vld [vmem:[%s6 + $0xc0] sm:$0xff]
        %v1206 = vld [vmem:[%s6 + $0xc8] sm:$0xff]
        %v1207 = vld [vmem:[%s6 + $0xd0] sm:$0xff]
        %v1208 = vld [vmem:[%s6 + $0xd8] sm:$0xff]
        %v1209 = vld [vmem:[%s6 + $0xe0] sm:$0xff]
        %v1210 = vld [vmem:[%s6 + $0xe8] sm:$0xff]
        %v1211 = vld [vmem:[%s6 + $0xf0] sm:$0xff]
        %v1212 = vld [vmem:[%s6 + $0xf8] sm:$0xff]
        %1214 = vset.pattern.permute.xlu0 0
        %1215 = vperm.xlu0 %1214, %v1181
        %v1216 = vpop.permute.xlu0 %1215
        %1219 = vset.pattern.permute.xlu0 0
        %1220 = vperm.xlu0 %1219, %v1182
        %v1221 = vpop.permute.xlu0 %1220
        %1224 = vset.pattern.permute.xlu0 0
        %1225 = vperm.xlu0 %1224, %v1183
        %v1226 = vpop.permute.xlu0 %1225
        %1229 = vset.pattern.permute.xlu0 0
        %1230 = vperm.xlu0 %1229, %v1184
        %v1231 = vpop.permute.xlu0 %1230
        %1234 = vset.pattern.permute.xlu0 0
        %1235 = vperm.xlu0 %1234, %v1185
        %v1236 = vpop.permute.xlu0 %1235
        %1239 = vset.pattern.permute.xlu0 0
        %1240 = vperm.xlu0 %1239, %v1186
        %v1241 = vpop.permute.xlu0 %1240
        %1244 = vset.pattern.permute.xlu0 0
        %1245 = vperm.xlu0 %1244, %v1187
        %v1246 = vpop.permute.xlu0 %1245
        %1249 = vset.pattern.permute.xlu0 0
        %1250 = vperm.xlu0 %1249, %v1188
        %v1251 = vpop.permute.xlu0 %1250
        %1254 = vset.pattern.permute.xlu0 0
        %1255 = vperm.xlu0 %1254, %v1189
        %v1256 = vpop.permute.xlu0 %1255
        %1259 = vset.pattern.permute.xlu0 0
        %1260 = vperm.xlu0 %1259, %v1190
        %v1261 = vpop.permute.xlu0 %1260
        %1264 = vset.pattern.permute.xlu0 0
        %1265 = vperm.xlu0 %1264, %v1191
        %v1266 = vpop.permute.xlu0 %1265
        %1269 = vset.pattern.permute.xlu0 0
        %1270 = vperm.xlu0 %1269, %v1192
        %v1271 = vpop.permute.xlu0 %1270
        %1274 = vset.pattern.permute.xlu0 0
        %1275 = vperm.xlu0 %1274, %v1193
        %v1276 = vpop.permute.xlu0 %1275
        %1279 = vset.pattern.permute.xlu0 0
        %1280 = vperm.xlu0 %1279, %v1194
        %v1281 = vpop.permute.xlu0 %1280
        %1284 = vset.pattern.permute.xlu0 0
        %1285 = vperm.xlu0 %1284, %v1195
        %v1286 = vpop.permute.xlu0 %1285
        %1289 = vset.pattern.permute.xlu0 0
        %1290 = vperm.xlu0 %1289, %v1196
        %v1291 = vpop.permute.xlu0 %1290
        %1294 = vset.pattern.permute.xlu0 0
        %1295 = vperm.xlu0 %1294, %v1197
        %v1296 = vpop.permute.xlu0 %1295
        %1299 = vset.pattern.permute.xlu0 0
        %1300 = vperm.xlu0 %1299, %v1198
        %v1301 = vpop.permute.xlu0 %1300
        %1304 = vset.pattern.permute.xlu0 0
        %1305 = vperm.xlu0 %1304, %v1199
        %v1306 = vpop.permute.xlu0 %1305
        %1309 = vset.pattern.permute.xlu0 0
        %1310 = vperm.xlu0 %1309, %v1200
        %v1311 = vpop.permute.xlu0 %1310
        %1314 = vset.pattern.permute.xlu0 0
        %1315 = vperm.xlu0 %1314, %v1201
        %v1316 = vpop.permute.xlu0 %1315
        %1319 = vset.pattern.permute.xlu0 0
        %1320 = vperm.xlu0 %1319, %v1202
        %v1321 = vpop.permute.xlu0 %1320
        %1324 = vset.pattern.permute.xlu0 0
        %1325 = vperm.xlu0 %1324, %v1203
        %v1326 = vpop.permute.xlu0 %1325
        %1329 = vset.pattern.permute.xlu0 0
        %1330 = vperm.xlu0 %1329, %v1204
        %v1331 = vpop.permute.xlu0 %1330
        %1334 = vset.pattern.permute.xlu0 0
        %1335 = vperm.xlu0 %1334, %v1205
        %v1336 = vpop.permute.xlu0 %1335
        %1339 = vset.pattern.permute.xlu0 0
        %1340 = vperm.xlu0 %1339, %v1206
        %v1341 = vpop.permute.xlu0 %1340
        %1344 = vset.pattern.permute.xlu0 0
        %1345 = vperm.xlu0 %1344, %v1207
        %v1346 = vpop.permute.xlu0 %1345
        %1349 = vset.pattern.permute.xlu0 0
        %1350 = vperm.xlu0 %1349, %v1208
        %v1351 = vpop.permute.xlu0 %1350
        %1354 = vset.pattern.permute.xlu0 0
        %1355 = vperm.xlu0 %1354, %v1209
        %v1356 = vpop.permute.xlu0 %1355
        %1359 = vset.pattern.permute.xlu0 0
        %1360 = vperm.xlu0 %1359, %v1210
        %v1361 = vpop.permute.xlu0 %1360
        %1364 = vset.pattern.permute.xlu0 0
        %1365 = vperm.xlu0 %1364, %v1211
        %v1366 = vpop.permute.xlu0 %1365
        %1369 = vset.pattern.permute.xlu0 0
        %1370 = vperm.xlu0 %1369, %v1212
        %v1371 = vpop.permute.xlu0 %1370
        %v1405 = vunpack.c.l.b16 %v1149
        %v1406 = vunpack.c.h.b16 %v1149
        %v1407 = vunpack.c.l.b16 %v1150
        %v1408 = vunpack.c.h.b16 %v1150
        %v1409 = vunpack.c.l.b16 %v1151
        %v1410 = vunpack.c.h.b16 %v1151
        %v1411 = vunpack.c.l.b16 %v1152
        %v1412 = vunpack.c.h.b16 %v1152
        %v1413 = vunpack.c.l.b16 %v1153
        %v1414 = vunpack.c.h.b16 %v1153
        %v1415 = vunpack.c.l.b16 %v1154
        %v1416 = vunpack.c.h.b16 %v1154
        %v1417 = vunpack.c.l.b16 %v1155
        %v1418 = vunpack.c.h.b16 %v1155
        %v1419 = vunpack.c.l.b16 %v1156
        %v1420 = vunpack.c.h.b16 %v1156
        %v1421 = vunpack.c.l.b16 %v1157
        %v1422 = vunpack.c.h.b16 %v1157
        %v1423 = vunpack.c.l.b16 %v1158
        %v1424 = vunpack.c.h.b16 %v1158
        %v1425 = vunpack.c.l.b16 %v1159
        %v1426 = vunpack.c.h.b16 %v1159
        %v1427 = vunpack.c.l.b16 %v1160
        %v1428 = vunpack.c.h.b16 %v1160
        %v1429 = vunpack.c.l.b16 %v1161
        %v1430 = vunpack.c.h.b16 %v1161
        %v1431 = vunpack.c.l.b16 %v1162
        %v1432 = vunpack.c.h.b16 %v1162
        %v1433 = vunpack.c.l.b16 %v1163
        %v1434 = vunpack.c.h.b16 %v1163
        %v1435 = vunpack.c.l.b16 %v1164
        %v1436 = vunpack.c.h.b16 %v1164
        %v1437 = vunpack.c.l.b16 %v1165
        %v1438 = vunpack.c.h.b16 %v1165
        %v1439 = vunpack.c.l.b16 %v1166
        %v1440 = vunpack.c.h.b16 %v1166
        %v1441 = vunpack.c.l.b16 %v1167
        %v1442 = vunpack.c.h.b16 %v1167
        %v1443 = vunpack.c.l.b16 %v1168
        %v1444 = vunpack.c.h.b16 %v1168
        %v1445 = vunpack.c.l.b16 %v1169
        %v1446 = vunpack.c.h.b16 %v1169
        %v1447 = vunpack.c.l.b16 %v1170
        %v1448 = vunpack.c.h.b16 %v1170
        %v1449 = vunpack.c.l.b16 %v1171
        %v1450 = vunpack.c.h.b16 %v1171
        %v1451 = vunpack.c.l.b16 %v1172
        %v1452 = vunpack.c.h.b16 %v1172
        %v1453 = vunpack.c.l.b16 %v1173
        %v1454 = vunpack.c.h.b16 %v1173
        %v1455 = vunpack.c.l.b16 %v1174
        %v1456 = vunpack.c.h.b16 %v1174
        %v1457 = vunpack.c.l.b16 %v1175
        %v1458 = vunpack.c.h.b16 %v1175
        %v1459 = vunpack.c.l.b16 %v1176
        %v1460 = vunpack.c.h.b16 %v1176
        %v1461 = vunpack.c.l.b16 %v1177
        %v1462 = vunpack.c.h.b16 %v1177
        %v1463 = vunpack.c.l.b16 %v1178
        %v1464 = vunpack.c.h.b16 %v1178
        %v1465 = vunpack.c.l.b16 %v1179
        %v1466 = vunpack.c.h.b16 %v1179
        %v1467 = vunpack.c.l.b16 %v1180
        %v1468 = vunpack.c.h.b16 %v1180
        %v1469 = vpack.c.b16 %v1407, %v1405
        %v1470 = vpack.c.b16 %v1408, %v1406
        %v1471 = vpack.c.b16 %v1411, %v1409
        %v1472 = vpack.c.b16 %v1412, %v1410
        %v1473 = vpack.c.b16 %v1415, %v1413
        %v1474 = vpack.c.b16 %v1416, %v1414
        %v1475 = vpack.c.b16 %v1419, %v1417
        %v1476 = vpack.c.b16 %v1420, %v1418
        %v1477 = vpack.c.b16 %v1423, %v1421
        %v1478 = vpack.c.b16 %v1424, %v1422
        %v1479 = vpack.c.b16 %v1427, %v1425
        %v1480 = vpack.c.b16 %v1428, %v1426
        %v1481 = vpack.c.b16 %v1431, %v1429
        %v1482 = vpack.c.b16 %v1432, %v1430
        %v1483 = vpack.c.b16 %v1435, %v1433
        %v1484 = vpack.c.b16 %v1436, %v1434
        %v1485 = vpack.c.b16 %v1439, %v1437
        %v1486 = vpack.c.b16 %v1440, %v1438
        %v1487 = vpack.c.b16 %v1443, %v1441
        %v1488 = vpack.c.b16 %v1444, %v1442
        %v1489 = vpack.c.b16 %v1447, %v1445
        %v1490 = vpack.c.b16 %v1448, %v1446
        %v1491 = vpack.c.b16 %v1451, %v1449
        %v1492 = vpack.c.b16 %v1452, %v1450
        %v1493 = vpack.c.b16 %v1455, %v1453
        %v1494 = vpack.c.b16 %v1456, %v1454
        %v1495 = vpack.c.b16 %v1459, %v1457
        %v1496 = vpack.c.b16 %v1460, %v1458
        %v1497 = vpack.c.b16 %v1463, %v1461
        %v1498 = vpack.c.b16 %v1464, %v1462
        %v1499 = vpack.c.b16 %v1467, %v1465
        %v1500 = vpack.c.b16 %v1468, %v1466
        %1533 = vmatprep.subr.bf16.mxu0 %v1134
        %1534 = vmatpush1.bf16.xpose.msra.mxu0 %v1133
        %1535 = vmatprep.subr.bf16.mxu0 %v1136
        %1536 = vmatpush1.bf16.xpose.msra.mxu0 %v1135
        %1537 = vmatprep.subr.bf16.mxu0 %v1138
        %1538 = vmatpush1.bf16.xpose.msra.mxu0 %v1137
        %1539 = vmatprep.subr.bf16.mxu0 %v1140
        %1540 = vmatpush1.bf16.xpose.msra.mxu0 %v1139
        %1541 = vmatprep.subr.bf16.mxu0 %v1142
        %1542 = vmatpush1.bf16.xpose.msra.mxu0 %v1141
        %1543 = vmatprep.subr.bf16.mxu0 %v1144
        %1544 = vmatpush1.bf16.xpose.msra.mxu0 %v1143
        %1545 = vmatprep.subr.bf16.mxu0 %v1146
        %1546 = vmatpush1.bf16.xpose.msra.mxu0 %v1145
        %1547 = vmatprep.subr.bf16.mxu0 %v1148
        %1548 = vmatpush1.bf16.xpose.msra.mxu0 %v1147
        %1549 = vmatprep.subr.bf16.mxu0 0
        %1550 = vmatpush1.bf16.xpose.msra.mxu0 0
        %1551 = vmatprep.subr.bf16.mxu0 0
        %1552 = vmatpush1.bf16.xpose.msra.mxu0 0
        %1553 = vmatprep.subr.bf16.mxu0 0
        %1554 = vmatpush1.bf16.xpose.msra.mxu0 0
        %1555 = vmatprep.subr.bf16.mxu0 0
        %1556 = vmatpush1.bf16.xpose.msra.mxu0 0
        %1557 = vmatprep.subr.bf16.mxu0 0
        %1558 = vmatpush1.bf16.xpose.msra.mxu0 0
        %1559 = vmatprep.subr.bf16.mxu0 0
        %1560 = vmatpush1.bf16.xpose.msra.mxu0 0
        %1561 = vmatprep.subr.bf16.mxu0 0
        %1562 = vmatpush1.bf16.xpose.msra.mxu0 0
        %1563 = vmatprep.subr.bf16.mxu0 0
        %1564 = vmatpush1.bf16.xpose.msra.mxu0 0
        %1565 = vmatprep.mubr.bf16.mxu0 %v1470
        %1566 = vmatmul.mubr.bf16.gmra.mrb[0].mxu0 %v1469
        %v1567 = vpop.f32.mrb[0].mxu0
        %v1568 = vadd.f32 %v1216, %v1567
        %v1569 = vpop.f32.mrb[0].mxu0
        %v1570 = vpop.f32.mrb[0].mxu0
        %v1571 = vadd.f32 %v1221, %v1570
        %v1572 = vpop.f32.mrb[0].mxu0
        %1573 = vmatprep.mubr.bf16.mxu0 %v1472
        %1574 = vmatmul.mubr.bf16.gmra.mrb[0].mxu0 %v1471
        %v1575 = vpop.f32.mrb[0].mxu0
        %v1576 = vadd.f32 %v1226, %v1575
        %v1577 = vpop.f32.mrb[0].mxu0
        %v1578 = vpop.f32.mrb[0].mxu0
        %v1579 = vadd.f32 %v1231, %v1578
        %v1580 = vpop.f32.mrb[0].mxu0
        %1581 = vmatprep.mubr.bf16.mxu0 %v1474
        %1582 = vmatmul.mubr.bf16.gmra.mrb[0].mxu0 %v1473
        %v1583 = vpop.f32.mrb[0].mxu0
        %v1584 = vadd.f32 %v1236, %v1583
        %v1585 = vpop.f32.mrb[0].mxu0
        %v1586 = vpop.f32.mrb[0].mxu0
        %v1587 = vadd.f32 %v1241, %v1586
        %v1588 = vpop.f32.mrb[0].mxu0
        %1589 = vmatprep.mubr.bf16.mxu0 %v1476
        %1590 = vmatmul.mubr.bf16.gmra.mrb[0].mxu0 %v1475
        %v1591 = vpop.f32.mrb[0].mxu0
        %v1592 = vadd.f32 %v1246, %v1591
        %v1593 = vpop.f32.mrb[0].mxu0
        %v1594 = vpop.f32.mrb[0].mxu0
        %v1595 = vadd.f32 %v1251, %v1594
        %v1596 = vpop.f32.mrb[0].mxu0
        %1597 = vmatprep.mubr.bf16.mxu0 %v1478
        %1598 = vmatmul.mubr.bf16.gmra.mrb[0].mxu0 %v1477
        %v1599 = vpop.f32.mrb[0].mxu0
        %v1600 = vadd.f32 %v1256, %v1599
        %v1601 = vpop.f32.mrb[0].mxu0
        %v1602 = vpop.f32.mrb[0].mxu0
        %v1603 = vadd.f32 %v1261, %v1602
        %v1604 = vpop.f32.mrb[0].mxu0
        %1605 = vmatprep.mubr.bf16.mxu0 %v1480
        %1606 = vmatmul.mubr.bf16.gmra.mrb[0].mxu0 %v1479
        %v1607 = vpop.f32.mrb[0].mxu0
        %v1608 = vadd.f32 %v1266, %v1607
        %v1609 = vpop.f32.mrb[0].mxu0
        %v1610 = vpop.f32.mrb[0].mxu0
        %v1611 = vadd.f32 %v1271, %v1610
        %v1612 = vpop.f32.mrb[0].mxu0
        %1613 = vmatprep.mubr.bf16.mxu0 %v1482
        %1614 = vmatmul.mubr.bf16.gmra.mrb[0].mxu0 %v1481
        %v1615 = vpop.f32.mrb[0].mxu0
        %v1616 = vadd.f32 %v1276, %v1615
        %v1617 = vpop.f32.mrb[0].mxu0
        %v1618 = vpop.f32.mrb[0].mxu0
        %v1619 = vadd.f32 %v1281, %v1618
        %v1620 = vpop.f32.mrb[0].mxu0
        %1621 = vmatprep.mubr.bf16.mxu0 %v1484
        %1622 = vmatmul.mubr.bf16.gmra.mrb[0].mxu0 %v1483
        %v1623 = vpop.f32.mrb[0].mxu0
        %v1624 = vadd.f32 %v1286, %v1623
        %v1625 = vpop.f32.mrb[0].mxu0
        %v1626 = vpop.f32.mrb[0].mxu0
        %v1627 = vadd.f32 %v1291, %v1626
        %v1628 = vpop.f32.mrb[0].mxu0
        %1629 = vmatprep.mubr.bf16.mxu0 %v1486
        %1630 = vmatmul.mubr.bf16.gmra.mrb[0].mxu0 %v1485
        %v1631 = vpop.f32.mrb[0].mxu0
        %v1632 = vadd.f32 %v1296, %v1631
        %v1633 = vpop.f32.mrb[0].mxu0
        %v1634 = vpop.f32.mrb[0].mxu0
        %v1635 = vadd.f32 %v1301, %v1634
        %v1636 = vpop.f32.mrb[0].mxu0
        %1637 = vmatprep.mubr.bf16.mxu0 %v1488
        %1638 = vmatmul.mubr.bf16.gmra.mrb[0].mxu0 %v1487
        %v1639 = vpop.f32.mrb[0].mxu0
        %v1640 = vadd.f32 %v1306, %v1639
        %v1641 = vpop.f32.mrb[0].mxu0
        %v1642 = vpop.f32.mrb[0].mxu0
        %v1643 = vadd.f32 %v1311, %v1642
        %v1644 = vpop.f32.mrb[0].mxu0
        %1645 = vmatprep.mubr.bf16.mxu0 %v1490
        %1646 = vmatmul.mubr.bf16.gmra.mrb[0].mxu0 %v1489
        %v1647 = vpop.f32.mrb[0].mxu0
        %v1648 = vadd.f32 %v1316, %v1647
        %v1649 = vpop.f32.mrb[0].mxu0
        %v1650 = vpop.f32.mrb[0].mxu0
        %v1651 = vadd.f32 %v1321, %v1650
        %v1652 = vpop.f32.mrb[0].mxu0
        %1653 = vmatprep.mubr.bf16.mxu0 %v1492
        %1654 = vmatmul.mubr.bf16.gmra.mrb[0].mxu0 %v1491
        %v1655 = vpop.f32.mrb[0].mxu0
        %v1656 = vadd.f32 %v1326, %v1655
        %v1657 = vpop.f32.mrb[0].mxu0
        %v1658 = vpop.f32.mrb[0].mxu0
        %v1659 = vadd.f32 %v1331, %v1658
        %v1660 = vpop.f32.mrb[0].mxu0
        %1661 = vmatprep.mubr.bf16.mxu0 %v1494
        %1662 = vmatmul.mubr.bf16.gmra.mrb[0].mxu0 %v1493
        %v1663 = vpop.f32.mrb[0].mxu0
        %v1664 = vadd.f32 %v1336, %v1663
        %v1665 = vpop.f32.mrb[0].mxu0
        %v1666 = vpop.f32.mrb[0].mxu0
        %v1667 = vadd.f32 %v1341, %v1666
        %v1668 = vpop.f32.mrb[0].mxu0
        %1669 = vmatprep.mubr.bf16.mxu0 %v1496
        %1670 = vmatmul.mubr.bf16.gmra.mrb[0].mxu0 %v1495
        %v1671 = vpop.f32.mrb[0].mxu0
        %v1672 = vadd.f32 %v1346, %v1671
        %v1673 = vpop.f32.mrb[0].mxu0
        %v1674 = vpop.f32.mrb[0].mxu0
        %v1675 = vadd.f32 %v1351, %v1674
        %v1676 = vpop.f32.mrb[0].mxu0
        %1677 = vmatprep.mubr.bf16.mxu0 %v1498
        %1678 = vmatmul.mubr.bf16.gmra.mrb[0].mxu0 %v1497
        %v1679 = vpop.f32.mrb[0].mxu0
        %v1680 = vadd.f32 %v1356, %v1679
        %v1681 = vpop.f32.mrb[0].mxu0
        %v1682 = vpop.f32.mrb[0].mxu0
        %v1683 = vadd.f32 %v1361, %v1682
        %v1684 = vpop.f32.mrb[0].mxu0
        %1685 = vmatprep.mubr.bf16.mxu0 %v1500
        %1686 = vmatmul.mubr.bf16.gmra.mrb[0].mxu0 %v1499
        %v1687 = vpop.f32.mrb[0].mxu0
        %v1688 = vadd.f32 %v1366, %v1687
        %v1689 = vpop.f32.mrb[0].mxu0
        %v1690 = vpop.f32.mrb[0].mxu0
        %v1691 = vadd.f32 %v1371, %v1690
        %v1692 = vpop.f32.mrb[0].mxu0
        %1693 = vdwg.mxu0
        %v1694 = vld [vmem:[%s7] sm:$0xff]
        %v1695 = vld [vmem:[%s7 + $0x8] sm:$0xff]
        %v1696 = vld [vmem:[%s7 + $0x10] sm:$0xff]
        %v1697 = vld [vmem:[%s7 + $0x18] sm:$0xff]
        %v1698 = vld [vmem:[%s7 + $0x20] sm:$0xff]
        %v1699 = vld [vmem:[%s7 + $0x28] sm:$0xff]
        %v1700 = vld [vmem:[%s7 + $0x30] sm:$0xff]
        %v1701 = vld [vmem:[%s7 + $0x38] sm:$0xff]
        %v1702 = vld [vmem:[%s7 + $0x40] sm:$0xff]
        %v1703 = vld [vmem:[%s7 + $0x48] sm:$0xff]
        %v1704 = vld [vmem:[%s7 + $0x50] sm:$0xff]
        %v1705 = vld [vmem:[%s7 + $0x58] sm:$0xff]
        %v1706 = vld [vmem:[%s7 + $0x60] sm:$0xff]
        %v1707 = vld [vmem:[%s7 + $0x68] sm:$0xff]
        %v1708 = vld [vmem:[%s7 + $0x70] sm:$0xff]
        %v1709 = vld [vmem:[%s7 + $0x78] sm:$0xff]
        %v1710 = vld [vmem:[%s7 + $0x80] sm:$0xff]
        %v1711 = vld [vmem:[%s7 + $0x88] sm:$0xff]
        %v1712 = vld [vmem:[%s7 + $0x90] sm:$0xff]
        %v1713 = vld [vmem:[%s7 + $0x98] sm:$0xff]
        %v1714 = vld [vmem:[%s7 + $0xa0] sm:$0xff]
        %v1715 = vld [vmem:[%s7 + $0xa8] sm:$0xff]
        %v1716 = vld [vmem:[%s7 + $0xb0] sm:$0xff]
        %v1717 = vld [vmem:[%s7 + $0xb8] sm:$0xff]
        %v1718 = vld [vmem:[%s7 + $0xc0] sm:$0xff]
        %v1719 = vld [vmem:[%s7 + $0xc8] sm:$0xff]
        %v1720 = vld [vmem:[%s7 + $0xd0] sm:$0xff]
        %v1721 = vld [vmem:[%s7 + $0xd8] sm:$0xff]
        %v1722 = vld [vmem:[%s7 + $0xe0] sm:$0xff]
        %v1723 = vld [vmem:[%s7 + $0xe8] sm:$0xff]
        %v1724 = vld [vmem:[%s7 + $0xf0] sm:$0xff]
        %v1725 = vld [vmem:[%s7 + $0xf8] sm:$0xff]
        %v1726 = vld [vmem:[%s8] sm:$0xff]
        %v1727 = vld [vmem:[%s8 + $0x8] sm:$0xff]
        %v1728 = vld [vmem:[%s8 + $0x10] sm:$0xff]
        %v1729 = vld [vmem:[%s8 + $0x18] sm:$0xff]
        %v1730 = vld [vmem:[%s8 + $0x20] sm:$0xff]
        %v1731 = vld [vmem:[%s8 + $0x28] sm:$0xff]
        %v1732 = vld [vmem:[%s8 + $0x30] sm:$0xff]
        %v1733 = vld [vmem:[%s8 + $0x38] sm:$0xff]
        %v1734 = vld [vmem:[%s8 + $0x40] sm:$0xff]
        %v1735 = vld [vmem:[%s8 + $0x48] sm:$0xff]
        %v1736 = vld [vmem:[%s8 + $0x50] sm:$0xff]
        %v1737 = vld [vmem:[%s8 + $0x58] sm:$0xff]
        %v1738 = vld [vmem:[%s8 + $0x60] sm:$0xff]
        %v1739 = vld [vmem:[%s8 + $0x68] sm:$0xff]
        %v1740 = vld [vmem:[%s8 + $0x70] sm:$0xff]
        %v1741 = vld [vmem:[%s8 + $0x78] sm:$0xff]
        %v1742 = vld [vmem:[%s8 + $0x80] sm:$0xff]
        %v1743 = vld [vmem:[%s8 + $0x88] sm:$0xff]
        %v1744 = vld [vmem:[%s8 + $0x90] sm:$0xff]
        %v1745 = vld [vmem:[%s8 + $0x98] sm:$0xff]
        %v1746 = vld [vmem:[%s8 + $0xa0] sm:$0xff]
        %v1747 = vld [vmem:[%s8 + $0xa8] sm:$0xff]
        %v1748 = vld [vmem:[%s8 + $0xb0] sm:$0xff]
        %v1749 = vld [vmem:[%s8 + $0xb8] sm:$0xff]
        %v1750 = vld [vmem:[%s8 + $0xc0] sm:$0xff]
        %v1751 = vld [vmem:[%s8 + $0xc8] sm:$0xff]
        %v1752 = vld [vmem:[%s8 + $0xd0] sm:$0xff]
        %v1753 = vld [vmem:[%s8 + $0xd8] sm:$0xff]
        %v1754 = vld [vmem:[%s8 + $0xe0] sm:$0xff]
        %v1755 = vld [vmem:[%s8 + $0xe8] sm:$0xff]
        %v1756 = vld [vmem:[%s8 + $0xf0] sm:$0xff]
        %v1757 = vld [vmem:[%s8 + $0xf8] sm:$0xff]
        %1759 = vset.pattern.permute.xlu0 0
        %1760 = vperm.xlu0 %1759, %v1726
        %v1761 = vpop.permute.xlu0 %1760
        %1764 = vset.pattern.permute.xlu0 0
        %1765 = vperm.xlu0 %1764, %v1727
        %v1766 = vpop.permute.xlu0 %1765
        %1769 = vset.pattern.permute.xlu0 0
        %1770 = vperm.xlu0 %1769, %v1728
        %v1771 = vpop.permute.xlu0 %1770
        %1774 = vset.pattern.permute.xlu0 0
        %1775 = vperm.xlu0 %1774, %v1729
        %v1776 = vpop.permute.xlu0 %1775
        %1779 = vset.pattern.permute.xlu0 0
        %1780 = vperm.xlu0 %1779, %v1730
        %v1781 = vpop.permute.xlu0 %1780
        %1784 = vset.pattern.permute.xlu0 0
        %1785 = vperm.xlu0 %1784, %v1731
        %v1786 = vpop.permute.xlu0 %1785
        %1789 = vset.pattern.permute.xlu0 0
        %1790 = vperm.xlu0 %1789, %v1732
        %v1791 = vpop.permute.xlu0 %1790
        %1794 = vset.pattern.permute.xlu0 0
        %1795 = vperm.xlu0 %1794, %v1733
        %v1796 = vpop.permute.xlu0 %1795
        %1799 = vset.pattern.permute.xlu0 0
        %1800 = vperm.xlu0 %1799, %v1734
        %v1801 = vpop.permute.xlu0 %1800
        %1804 = vset.pattern.permute.xlu0 0
        %1805 = vperm.xlu0 %1804, %v1735
        %v1806 = vpop.permute.xlu0 %1805
        %1809 = vset.pattern.permute.xlu0 0
        %1810 = vperm.xlu0 %1809, %v1736
        %v1811 = vpop.permute.xlu0 %1810
        %1814 = vset.pattern.permute.xlu0 0
        %1815 = vperm.xlu0 %1814, %v1737
        %v1816 = vpop.permute.xlu0 %1815
        %1819 = vset.pattern.permute.xlu0 0
        %1820 = vperm.xlu0 %1819, %v1738
        %v1821 = vpop.permute.xlu0 %1820
        %1824 = vset.pattern.permute.xlu0 0
        %1825 = vperm.xlu0 %1824, %v1739
        %v1826 = vpop.permute.xlu0 %1825
        %1829 = vset.pattern.permute.xlu0 0
        %1830 = vperm.xlu0 %1829, %v1740
        %v1831 = vpop.permute.xlu0 %1830
        %1834 = vset.pattern.permute.xlu0 0
        %1835 = vperm.xlu0 %1834, %v1741
        %v1836 = vpop.permute.xlu0 %1835
        %1839 = vset.pattern.permute.xlu0 0
        %1840 = vperm.xlu0 %1839, %v1742
        %v1841 = vpop.permute.xlu0 %1840
        %1844 = vset.pattern.permute.xlu0 0
        %1845 = vperm.xlu0 %1844, %v1743
        %v1846 = vpop.permute.xlu0 %1845
        %1849 = vset.pattern.permute.xlu0 0
        %1850 = vperm.xlu0 %1849, %v1744
        %v1851 = vpop.permute.xlu0 %1850
        %1854 = vset.pattern.permute.xlu0 0
        %1855 = vperm.xlu0 %1854, %v1745
        %v1856 = vpop.permute.xlu0 %1855
        %1859 = vset.pattern.permute.xlu0 0
        %1860 = vperm.xlu0 %1859, %v1746
        %v1861 = vpop.permute.xlu0 %1860
        %1864 = vset.pattern.permute.xlu0 0
        %1865 = vperm.xlu0 %1864, %v1747
        %v1866 = vpop.permute.xlu0 %1865
        %1869 = vset.pattern.permute.xlu0 0
        %1870 = vperm.xlu0 %1869, %v1748
        %v1871 = vpop.permute.xlu0 %1870
        %1874 = vset.pattern.permute.xlu0 0
        %1875 = vperm.xlu0 %1874, %v1749
        %v1876 = vpop.permute.xlu0 %1875
        %1879 = vset.pattern.permute.xlu0 0
        %1880 = vperm.xlu0 %1879, %v1750
        %v1881 = vpop.permute.xlu0 %1880
        %1884 = vset.pattern.permute.xlu0 0
        %1885 = vperm.xlu0 %1884, %v1751
        %v1886 = vpop.permute.xlu0 %1885
        %1889 = vset.pattern.permute.xlu0 0
        %1890 = vperm.xlu0 %1889, %v1752
        %v1891 = vpop.permute.xlu0 %1890
        %1894 = vset.pattern.permute.xlu0 0
        %1895 = vperm.xlu0 %1894, %v1753
        %v1896 = vpop.permute.xlu0 %1895
        %1899 = vset.pattern.permute.xlu0 0
        %1900 = vperm.xlu0 %1899, %v1754
        %v1901 = vpop.permute.xlu0 %1900
        %1904 = vset.pattern.permute.xlu0 0
        %1905 = vperm.xlu0 %1904, %v1755
        %v1906 = vpop.permute.xlu0 %1905
        %1909 = vset.pattern.permute.xlu0 0
        %1910 = vperm.xlu0 %1909, %v1756
        %v1911 = vpop.permute.xlu0 %1910
        %1914 = vset.pattern.permute.xlu0 0
        %1915 = vperm.xlu0 %1914, %v1757
        %v1916 = vpop.permute.xlu0 %1915
        %v1950 = vunpack.c.l.b16 %v1694
        %v1951 = vunpack.c.h.b16 %v1694
        %v1952 = vunpack.c.l.b16 %v1695
        %v1953 = vunpack.c.h.b16 %v1695
        %v1954 = vunpack.c.l.b16 %v1696
        %v1955 = vunpack.c.h.b16 %v1696
        %v1956 = vunpack.c.l.b16 %v1697
        %v1957 = vunpack.c.h.b16 %v1697
        %v1958 = vunpack.c.l.b16 %v1698
        %v1959 = vunpack.c.h.b16 %v1698
        %v1960 = vunpack.c.l.b16 %v1699
        %v1961 = vunpack.c.h.b16 %v1699
        %v1962 = vunpack.c.l.b16 %v1700
        %v1963 = vunpack.c.h.b16 %v1700
        %v1964 = vunpack.c.l.b16 %v1701
        %v1965 = vunpack.c.h.b16 %v1701
        %v1966 = vunpack.c.l.b16 %v1702
        %v1967 = vunpack.c.h.b16 %v1702
        %v1968 = vunpack.c.l.b16 %v1703
        %v1969 = vunpack.c.h.b16 %v1703
        %v1970 = vunpack.c.l.b16 %v1704
        %v1971 = vunpack.c.h.b16 %v1704
        %v1972 = vunpack.c.l.b16 %v1705
        %v1973 = vunpack.c.h.b16 %v1705
        %v1974 = vunpack.c.l.b16 %v1706
        %v1975 = vunpack.c.h.b16 %v1706
        %v1976 = vunpack.c.l.b16 %v1707
        %v1977 = vunpack.c.h.b16 %v1707
        %v1978 = vunpack.c.l.b16 %v1708
        %v1979 = vunpack.c.h.b16 %v1708
        %v1980 = vunpack.c.l.b16 %v1709
        %v1981 = vunpack.c.h.b16 %v1709
        %v1982 = vunpack.c.l.b16 %v1710
        %v1983 = vunpack.c.h.b16 %v1710
        %v1984 = vunpack.c.l.b16 %v1711
        %v1985 = vunpack.c.h.b16 %v1711
        %v1986 = vunpack.c.l.b16 %v1712
        %v1987 = vunpack.c.h.b16 %v1712
        %v1988 = vunpack.c.l.b16 %v1713
        %v1989 = vunpack.c.h.b16 %v1713
        %v1990 = vunpack.c.l.b16 %v1714
        %v1991 = vunpack.c.h.b16 %v1714
        %v1992 = vunpack.c.l.b16 %v1715
        %v1993 = vunpack.c.h.b16 %v1715
        %v1994 = vunpack.c.l.b16 %v1716
        %v1995 = vunpack.c.h.b16 %v1716
        %v1996 = vunpack.c.l.b16 %v1717
        %v1997 = vunpack.c.h.b16 %v1717
        %v1998 = vunpack.c.l.b16 %v1718
        %v1999 = vunpack.c.h.b16 %v1718
        %v2000 = vunpack.c.l.b16 %v1719
        %v2001 = vunpack.c.h.b16 %v1719
        %v2002 = vunpack.c.l.b16 %v1720
        %v2003 = vunpack.c.h.b16 %v1720
        %v2004 = vunpack.c.l.b16 %v1721
        %v2005 = vunpack.c.h.b16 %v1721
        %v2006 = vunpack.c.l.b16 %v1722
        %v2007 = vunpack.c.h.b16 %v1722
        %v2008 = vunpack.c.l.b16 %v1723
        %v2009 = vunpack.c.h.b16 %v1723
        %v2010 = vunpack.c.l.b16 %v1724
        %v2011 = vunpack.c.h.b16 %v1724
        %v2012 = vunpack.c.l.b16 %v1725
        %v2013 = vunpack.c.h.b16 %v1725
        %v2014 = vpack.c.b16 %v1952, %v1950
        %v2015 = vpack.c.b16 %v1953, %v1951
        %v2016 = vpack.c.b16 %v1956, %v1954
        %v2017 = vpack.c.b16 %v1957, %v1955
        %v2018 = vpack.c.b16 %v1960, %v1958
        %v2019 = vpack.c.b16 %v1961, %v1959
        %v2020 = vpack.c.b16 %v1964, %v1962
        %v2021 = vpack.c.b16 %v1965, %v1963
        %v2022 = vpack.c.b16 %v1968, %v1966
        %v2023 = vpack.c.b16 %v1969, %v1967
        %v2024 = vpack.c.b16 %v1972, %v1970
        %v2025 = vpack.c.b16 %v1973, %v1971
        %v2026 = vpack.c.b16 %v1976, %v1974
        %v2027 = vpack.c.b16 %v1977, %v1975
        %v2028 = vpack.c.b16 %v1980, %v1978
        %v2029 = vpack.c.b16 %v1981, %v1979
        %v2030 = vpack.c.b16 %v1984, %v1982
        %v2031 = vpack.c.b16 %v1985, %v1983
        %v2032 = vpack.c.b16 %v1988, %v1986
        %v2033 = vpack.c.b16 %v1989, %v1987
        %v2034 = vpack.c.b16 %v1992, %v1990
        %v2035 = vpack.c.b16 %v1993, %v1991
        %v2036 = vpack.c.b16 %v1996, %v1994
        %v2037 = vpack.c.b16 %v1997, %v1995
        %v2038 = vpack.c.b16 %v2000, %v1998
        %v2039 = vpack.c.b16 %v2001, %v1999
        %v2040 = vpack.c.b16 %v2004, %v2002
        %v2041 = vpack.c.b16 %v2005, %v2003
        %v2042 = vpack.c.b16 %v2008, %v2006
        %v2043 = vpack.c.b16 %v2009, %v2007
        %v2044 = vpack.c.b16 %v2012, %v2010
        %v2045 = vpack.c.b16 %v2013, %v2011
        %2078 = vmatprep.subr.bf16.mxu0 %v1134
        %2079 = vmatpush1.bf16.xpose.msra.mxu0 %v1133
        %2080 = vmatprep.subr.bf16.mxu0 %v1136
        %2081 = vmatpush1.bf16.xpose.msra.mxu0 %v1135
        %2082 = vmatprep.subr.bf16.mxu0 %v1138
        %2083 = vmatpush1.bf16.xpose.msra.mxu0 %v1137
        %2084 = vmatprep.subr.bf16.mxu0 %v1140
        %2085 = vmatpush1.bf16.xpose.msra.mxu0 %v1139
        %2086 = vmatprep.subr.bf16.mxu0 %v1142
        %2087 = vmatpush1.bf16.xpose.msra.mxu0 %v1141
        %2088 = vmatprep.subr.bf16.mxu0 %v1144
        %2089 = vmatpush1.bf16.xpose.msra.mxu0 %v1143
        %2090 = vmatprep.subr.bf16.mxu0 %v1146
        %2091 = vmatpush1.bf16.xpose.msra.mxu0 %v1145
        %2092 = vmatprep.subr.bf16.mxu0 %v1148
        %2093 = vmatpush1.bf16.xpose.msra.mxu0 %v1147
        %2094 = vmatprep.subr.bf16.mxu0 0
        %2095 = vmatpush1.bf16.xpose.msra.mxu0 0
        %2096 = vmatprep.subr.bf16.mxu0 0
        %2097 = vmatpush1.bf16.xpose.msra.mxu0 0
        %2098 = vmatprep.subr.bf16.mxu0 0
        %2099 = vmatpush1.bf16.xpose.msra.mxu0 0
        %2100 = vmatprep.subr.bf16.mxu0 0
        %2101 = vmatpush1.bf16.xpose.msra.mxu0 0
        %2102 = vmatprep.subr.bf16.mxu0 0
        %2103 = vmatpush1.bf16.xpose.msra.mxu0 0
        %2104 = vmatprep.subr.bf16.mxu0 0
        %2105 = vmatpush1.bf16.xpose.msra.mxu0 0
        %2106 = vmatprep.subr.bf16.mxu0 0
        %2107 = vmatpush1.bf16.xpose.msra.mxu0 0
        %2108 = vmatprep.subr.bf16.mxu0 0
        %2109 = vmatpush1.bf16.xpose.msra.mxu0 0
        %2110 = vmatprep.mubr.bf16.mxu0 %v2015
        %2111 = vmatmul.mubr.bf16.gmra.mrb[0].mxu0 %v2014
        %v2112 = vpop.f32.mrb[0].mxu0
        %v2113 = vadd.f32 %v1761, %v2112
        %v2114 = vpop.f32.mrb[0].mxu0
        %v2115 = vpop.f32.mrb[0].mxu0
        %v2116 = vadd.f32 %v1766, %v2115
        %v2117 = vpop.f32.mrb[0].mxu0
        %2118 = vmatprep.mubr.bf16.mxu0 %v2017
        %2119 = vmatmul.mubr.bf16.gmra.mrb[0].mxu0 %v2016
        %v2120 = vpop.f32.mrb[0].mxu0
        %v2121 = vadd.f32 %v1771, %v2120
        %v2122 = vpop.f32.mrb[0].mxu0
        %v2123 = vpop.f32.mrb[0].mxu0
        %v2124 = vadd.f32 %v1776, %v2123
        %v2125 = vpop.f32.mrb[0].mxu0
        %2126 = vmatprep.mubr.bf16.mxu0 %v2019
        %2127 = vmatmul.mubr.bf16.gmra.mrb[0].mxu0 %v2018
        %v2128 = vpop.f32.mrb[0].mxu0
        %v2129 = vadd.f32 %v1781, %v2128
        %v2130 = vpop.f32.mrb[0].mxu0
        %v2131 = vpop.f32.mrb[0].mxu0
        %v2132 = vadd.f32 %v1786, %v2131
        %v2133 = vpop.f32.mrb[0].mxu0
        %2134 = vmatprep.mubr.bf16.mxu0 %v2021
        %2135 = vmatmul.mubr.bf16.gmra.mrb[0].mxu0 %v2020
        %v2136 = vpop.f32.mrb[0].mxu0
        %v2137 = vadd.f32 %v1791, %v2136
        %v2138 = vpop.f32.mrb[0].mxu0
        %v2139 = vpop.f32.mrb[0].mxu0
        %v2140 = vadd.f32 %v1796, %v2139
        %v2141 = vpop.f32.mrb[0].mxu0
        %2142 = vmatprep.mubr.bf16.mxu0 %v2023
        %2143 = vmatmul.mubr.bf16.gmra.mrb[0].mxu0 %v2022
        %v2144 = vpop.f32.mrb[0].mxu0
        %v2145 = vadd.f32 %v1801, %v2144
        %v2146 = vpop.f32.mrb[0].mxu0
        %v2147 = vpop.f32.mrb[0].mxu0
        %v2148 = vadd.f32 %v1806, %v2147
        %v2149 = vpop.f32.mrb[0].mxu0
        %2150 = vmatprep.mubr.bf16.mxu0 %v2025
        %2151 = vmatmul.mubr.bf16.gmra.mrb[0].mxu0 %v2024
        %v2152 = vpop.f32.mrb[0].mxu0
        %v2153 = vadd.f32 %v1811, %v2152
        %v2154 = vpop.f32.mrb[0].mxu0
        %v2155 = vpop.f32.mrb[0].mxu0
        %v2156 = vadd.f32 %v1816, %v2155
        %v2157 = vpop.f32.mrb[0].mxu0
        %2158 = vmatprep.mubr.bf16.mxu0 %v2027
        %2159 = vmatmul.mubr.bf16.gmra.mrb[0].mxu0 %v2026
        %v2160 = vpop.f32.mrb[0].mxu0
        %v2161 = vadd.f32 %v1821, %v2160
        %v2162 = vpop.f32.mrb[0].mxu0
        %v2163 = vpop.f32.mrb[0].mxu0
        %v2164 = vadd.f32 %v1826, %v2163
        %v2165 = vpop.f32.mrb[0].mxu0
        %2166 = vmatprep.mubr.bf16.mxu0 %v2029
        %2167 = vmatmul.mubr.bf16.gmra.mrb[0].mxu0 %v2028
        %v2168 = vpop.f32.mrb[0].mxu0
        %v2169 = vadd.f32 %v1831, %v2168
        %v2170 = vpop.f32.mrb[0].mxu0
        %v2171 = vpop.f32.mrb[0].mxu0
        %v2172 = vadd.f32 %v1836, %v2171
        %v2173 = vpop.f32.mrb[0].mxu0
        %2174 = vmatprep.mubr.bf16.mxu0 %v2031
        %2175 = vmatmul.mubr.bf16.gmra.mrb[0].mxu0 %v2030
        %v2176 = vpop.f32.mrb[0].mxu0
        %v2177 = vadd.f32 %v1841, %v2176
        %v2178 = vpop.f32.mrb[0].mxu0
        %v2179 = vpop.f32.mrb[0].mxu0
        %v2180 = vadd.f32 %v1846, %v2179
        %v2181 = vpop.f32.mrb[0].mxu0
        %2182 = vmatprep.mubr.bf16.mxu0 %v2033
        %2183 = vmatmul.mubr.bf16.gmra.mrb[0].mxu0 %v2032
        %v2184 = vpop.f32.mrb[0].mxu0
        %v2185 = vadd.f32 %v1851, %v2184
        %v2186 = vpop.f32.mrb[0].mxu0
        %v2187 = vpop.f32.mrb[0].mxu0
        %v2188 = vadd.f32 %v1856, %v2187
        %v2189 = vpop.f32.mrb[0].mxu0
        %2190 = vmatprep.mubr.bf16.mxu0 %v2035
        %2191 = vmatmul.mubr.bf16.gmra.mrb[0].mxu0 %v2034
        %v2192 = vpop.f32.mrb[0].mxu0
        %v2193 = vadd.f32 %v1861, %v2192
        %v2194 = vpop.f32.mrb[0].mxu0
        %v2195 = vpop.f32.mrb[0].mxu0
        %v2196 = vadd.f32 %v1866, %v2195
        %v2197 = vpop.f32.mrb[0].mxu0
        %2198 = vmatprep.mubr.bf16.mxu0 %v2037
        %2199 = vmatmul.mubr.bf16.gmra.mrb[0].mxu0 %v2036
        %v2200 = vpop.f32.mrb[0].mxu0
        %v2201 = vadd.f32 %v1871, %v2200
        %v2202 = vpop.f32.mrb[0].mxu0
        %v2203 = vpop.f32.mrb[0].mxu0
        %v2204 = vadd.f32 %v1876, %v2203
        %v2205 = vpop.f32.mrb[0].mxu0
        %2206 = vmatprep.mubr.bf16.mxu0 %v2039
        %2207 = vmatmul.mubr.bf16.gmra.mrb[0].mxu0 %v2038
        %v2208 = vpop.f32.mrb[0].mxu0
        %v2209 = vadd.f32 %v1881, %v2208
        %v2210 = vpop.f32.mrb[0].mxu0
        %v2211 = vpop.f32.mrb[0].mxu0
        %v2212 = vadd.f32 %v1886, %v2211
        %v2213 = vpop.f32.mrb[0].mxu0
        %2214 = vmatprep.mubr.bf16.mxu0 %v2041
        %2215 = vmatmul.mubr.bf16.gmra.mrb[0].mxu0 %v2040
        %v2216 = vpop.f32.mrb[0].mxu0
        %v2217 = vadd.f32 %v1891, %v2216
        %v2218 = vpop.f32.mrb[0].mxu0
        %v2219 = vpop.f32.mrb[0].mxu0
        %v2220 = vadd.f32 %v1896, %v2219
        %v2221 = vpop.f32.mrb[0].mxu0
        %2222 = vmatprep.mubr.bf16.mxu0 %v2043
        %2223 = vmatmul.mubr.bf16.gmra.mrb[0].mxu0 %v2042
        %v2224 = vpop.f32.mrb[0].mxu0
        %v2225 = vadd.f32 %v1901, %v2224
        %v2226 = vpop.f32.mrb[0].mxu0
        %v2227 = vpop.f32.mrb[0].mxu0
        %v2228 = vadd.f32 %v1906, %v2227
        %v2229 = vpop.f32.mrb[0].mxu0
        %2230 = vmatprep.mubr.bf16.mxu0 %v2045
        %2231 = vmatmul.mubr.bf16.gmra.mrb[0].mxu0 %v2044
        %v2232 = vpop.f32.mrb[0].mxu0
        %v2233 = vadd.f32 %v1911, %v2232
        %v2234 = vpop.f32.mrb[0].mxu0
        %v2235 = vpop.f32.mrb[0].mxu0
        %v2236 = vadd.f32 %v1916, %v2235
        %v2237 = vpop.f32.mrb[0].mxu0
        %2238 = vdwg.mxu0
        %v2239 = vpack.c.bf16 %v1571, %v1568
        %v2240 = vpack.c.bf16 %v1579, %v1576
        %v2241 = vpack.c.bf16 %v1587, %v1584
        %v2242 = vpack.c.bf16 %v1595, %v1592
        %v2243 = vpack.c.bf16 %v1603, %v1600
        %v2244 = vpack.c.bf16 %v1611, %v1608
        %v2245 = vpack.c.bf16 %v1619, %v1616
        %v2246 = vpack.c.bf16 %v1627, %v1624
        %v2247 = vpack.c.bf16 %v1635, %v1632
        %v2248 = vpack.c.bf16 %v1643, %v1640
        %v2249 = vpack.c.bf16 %v1651, %v1648
        %v2250 = vpack.c.bf16 %v1659, %v1656
        %v2251 = vpack.c.bf16 %v1667, %v1664
        %v2252 = vpack.c.bf16 %v1675, %v1672
        %v2253 = vpack.c.bf16 %v1683, %v1680
        %v2254 = vpack.c.bf16 %v1691, %v1688
        %v2271 = vunpack.c.l.b16 %v2239
        %v2272 = vunpack.c.h.b16 %v2239
        %v2273 = vunpack.c.l.b16 %v2240
        %v2274 = vunpack.c.h.b16 %v2240
        %v2275 = vunpack.c.l.b16 %v2241
        %v2276 = vunpack.c.h.b16 %v2241
        %v2277 = vunpack.c.l.b16 %v2242
        %v2278 = vunpack.c.h.b16 %v2242
        %v2279 = vunpack.c.l.b16 %v2243
        %v2280 = vunpack.c.h.b16 %v2243
        %v2281 = vunpack.c.l.b16 %v2244
        %v2282 = vunpack.c.h.b16 %v2244
        %v2283 = vunpack.c.l.b16 %v2245
        %v2284 = vunpack.c.h.b16 %v2245
        %v2285 = vunpack.c.l.b16 %v2246
        %v2286 = vunpack.c.h.b16 %v2246
        %v2287 = vunpack.c.l.b16 %v2247
        %v2288 = vunpack.c.h.b16 %v2247
        %v2289 = vunpack.c.l.b16 %v2248
        %v2290 = vunpack.c.h.b16 %v2248
        %v2291 = vunpack.c.l.b16 %v2249
        %v2292 = vunpack.c.h.b16 %v2249
        %v2293 = vunpack.c.l.b16 %v2250
        %v2294 = vunpack.c.h.b16 %v2250
        %v2295 = vunpack.c.l.b16 %v2251
        %v2296 = vunpack.c.h.b16 %v2251
        %v2297 = vunpack.c.l.b16 %v2252
        %v2298 = vunpack.c.h.b16 %v2252
        %v2299 = vunpack.c.l.b16 %v2253
        %v2300 = vunpack.c.h.b16 %v2253
        %v2301 = vunpack.c.l.b16 %v2254
        %v2302 = vunpack.c.h.b16 %v2254
        %v2303 = vpack.c.b16 %v2271, %v2271
        %v2304 = vpack.c.b16 %v2272, %v2272
        %v2305 = vpack.c.b16 %v2273, %v2273
        %v2306 = vpack.c.b16 %v2274, %v2274
        %v2307 = vpack.c.b16 %v2275, %v2275
        %v2308 = vpack.c.b16 %v2276, %v2276
        %v2309 = vpack.c.b16 %v2277, %v2277
        %v2310 = vpack.c.b16 %v2278, %v2278
        %v2311 = vpack.c.b16 %v2279, %v2279
        %v2312 = vpack.c.b16 %v2280, %v2280
        %v2313 = vpack.c.b16 %v2281, %v2281
        %v2314 = vpack.c.b16 %v2282, %v2282
        %v2315 = vpack.c.b16 %v2283, %v2283
        %v2316 = vpack.c.b16 %v2284, %v2284
        %v2317 = vpack.c.b16 %v2285, %v2285
        %v2318 = vpack.c.b16 %v2286, %v2286
        %v2319 = vpack.c.b16 %v2287, %v2287
        %v2320 = vpack.c.b16 %v2288, %v2288
        %v2321 = vpack.c.b16 %v2289, %v2289
        %v2322 = vpack.c.b16 %v2290, %v2290
        %v2323 = vpack.c.b16 %v2291, %v2291
        %v2324 = vpack.c.b16 %v2292, %v2292
        %v2325 = vpack.c.b16 %v2293, %v2293
        %v2326 = vpack.c.b16 %v2294, %v2294
        %v2327 = vpack.c.b16 %v2295, %v2295
        %v2328 = vpack.c.b16 %v2296, %v2296
        %v2329 = vpack.c.b16 %v2297, %v2297
        %v2330 = vpack.c.b16 %v2298, %v2298
        %v2331 = vpack.c.b16 %v2299, %v2299
        %v2332 = vpack.c.b16 %v2300, %v2300
        %v2333 = vpack.c.b16 %v2301, %v2301
        %v2334 = vpack.c.b16 %v2302, %v2302
        %2367 = vst [vmem:[%s402] sm:$0xf] %v2303
        %2368 = vst [vmem:[%s402 + $0x4] sm:$0xf] %v2304
        %2369 = vst [vmem:[%s402 + $0x8] sm:$0xf] %v2305
        %2370 = vst [vmem:[%s402 + $0xc] sm:$0xf] %v2306
        %2371 = vst [vmem:[%s402 + $0x10] sm:$0xf] %v2307
        %2372 = vst [vmem:[%s402 + $0x14] sm:$0xf] %v2308
        %2373 = vst [vmem:[%s402 + $0x18] sm:$0xf] %v2309
        %2374 = vst [vmem:[%s402 + $0x1c] sm:$0xf] %v2310
        %2375 = vst [vmem:[%s402 + $0x20] sm:$0xf] %v2311
        %2376 = vst [vmem:[%s402 + $0x24] sm:$0xf] %v2312
        %2377 = vst [vmem:[%s402 + $0x28] sm:$0xf] %v2313
        %2378 = vst [vmem:[%s402 + $0x2c] sm:$0xf] %v2314
        %2379 = vst [vmem:[%s402 + $0x30] sm:$0xf] %v2315
        %2380 = vst [vmem:[%s402 + $0x34] sm:$0xf] %v2316
        %2381 = vst [vmem:[%s402 + $0x38] sm:$0xf] %v2317
        %2382 = vst [vmem:[%s402 + $0x3c] sm:$0xf] %v2318
        %2383 = vst [vmem:[%s402 + $0x40] sm:$0xf] %v2319
        %2384 = vst [vmem:[%s402 + $0x44] sm:$0xf] %v2320
        %2385 = vst [vmem:[%s402 + $0x48] sm:$0xf] %v2321
        %2386 = vst [vmem:[%s402 + $0x4c] sm:$0xf] %v2322
        %2387 = vst [vmem:[%s402 + $0x50] sm:$0xf] %v2323
        %2388 = vst [vmem:[%s402 + $0x54] sm:$0xf] %v2324
        %2389 = vst [vmem:[%s402 + $0x58] sm:$0xf] %v2325
        %2390 = vst [vmem:[%s402 + $0x5c] sm:$0xf] %v2326
        %2391 = vst [vmem:[%s402 + $0x60] sm:$0xf] %v2327
        %2392 = vst [vmem:[%s402 + $0x64] sm:$0xf] %v2328
        %2393 = vst [vmem:[%s402 + $0x68] sm:$0xf] %v2329
        %2394 = vst [vmem:[%s402 + $0x6c] sm:$0xf] %v2330
        %2395 = vst [vmem:[%s402 + $0x70] sm:$0xf] %v2331
        %2396 = vst [vmem:[%s402 + $0x74] sm:$0xf] %v2332
        %2397 = vst [vmem:[%s402 + $0x78] sm:$0xf] %v2333
        %2398 = vst [vmem:[%s402 + $0x7c] sm:$0xf] %v2334
        %v2399 = vpack.c.bf16 %v2116, %v2113
        %v2400 = vpack.c.bf16 %v2124, %v2121
        %v2401 = vpack.c.bf16 %v2132, %v2129
        %v2402 = vpack.c.bf16 %v2140, %v2137
        %v2403 = vpack.c.bf16 %v2148, %v2145
        %v2404 = vpack.c.bf16 %v2156, %v2153
        %v2405 = vpack.c.bf16 %v2164, %v2161
        %v2406 = vpack.c.bf16 %v2172, %v2169
        %v2407 = vpack.c.bf16 %v2180, %v2177
        %v2408 = vpack.c.bf16 %v2188, %v2185
        %v2409 = vpack.c.bf16 %v2196, %v2193
        %v2410 = vpack.c.bf16 %v2204, %v2201
        %v2411 = vpack.c.bf16 %v2212, %v2209
        %v2412 = vpack.c.bf16 %v2220, %v2217
        %v2413 = vpack.c.bf16 %v2228, %v2225
        %v2414 = vpack.c.bf16 %v2236, %v2233
        %v2431 = vunpack.c.l.b16 %v2399
        %v2432 = vunpack.c.h.b16 %v2399
        %v2433 = vunpack.c.l.b16 %v2400
        %v2434 = vunpack.c.h.b16 %v2400
        %v2435 = vunpack.c.l.b16 %v2401
        %v2436 = vunpack.c.h.b16 %v2401
        %v2437 = vunpack.c.l.b16 %v2402
        %v2438 = vunpack.c.h.b16 %v2402
        %v2439 = vunpack.c.l.b16 %v2403
        %v2440 = vunpack.c.h.b16 %v2403
        %v2441 = vunpack.c.l.b16 %v2404
        %v2442 = vunpack.c.h.b16 %v2404
        %v2443 = vunpack.c.l.b16 %v2405
        %v2444 = vunpack.c.h.b16 %v2405
        %v2445 = vunpack.c.l.b16 %v2406
        %v2446 = vunpack.c.h.b16 %v2406
        %v2447 = vunpack.c.l.b16 %v2407
        %v2448 = vunpack.c.h.b16 %v2407
        %v2449 = vunpack.c.l.b16 %v2408
        %v2450 = vunpack.c.h.b16 %v2408
        %v2451 = vunpack.c.l.b16 %v2409
        %v2452 = vunpack.c.h.b16 %v2409
        %v2453 = vunpack.c.l.b16 %v2410
        %v2454 = vunpack.c.h.b16 %v2410
        %v2455 = vunpack.c.l.b16 %v2411
        %v2456 = vunpack.c.h.b16 %v2411
        %v2457 = vunpack.c.l.b16 %v2412
        %v2458 = vunpack.c.h.b16 %v2412
        %v2459 = vunpack.c.l.b16 %v2413
        %v2460 = vunpack.c.h.b16 %v2413
        %v2461 = vunpack.c.l.b16 %v2414
        %v2462 = vunpack.c.h.b16 %v2414
        %v2463 = vpack.c.b16 %v2431, %v2431
        %v2464 = vpack.c.b16 %v2432, %v2432
        %v2465 = vpack.c.b16 %v2433, %v2433
        %v2466 = vpack.c.b16 %v2434, %v2434
        %v2467 = vpack.c.b16 %v2435, %v2435
        %v2468 = vpack.c.b16 %v2436, %v2436
        %v2469 = vpack.c.b16 %v2437, %v2437
        %v2470 = vpack.c.b16 %v2438, %v2438
        %v2471 = vpack.c.b16 %v2439, %v2439
        %v2472 = vpack.c.b16 %v2440, %v2440
        %v2473 = vpack.c.b16 %v2441, %v2441
        %v2474 = vpack.c.b16 %v2442, %v2442
        %v2475 = vpack.c.b16 %v2443, %v2443
        %v2476 = vpack.c.b16 %v2444, %v2444
        %v2477 = vpack.c.b16 %v2445, %v2445
        %v2478 = vpack.c.b16 %v2446, %v2446
        %v2479 = vpack.c.b16 %v2447, %v2447
        %v2480 = vpack.c.b16 %v2448, %v2448
        %v2481 = vpack.c.b16 %v2449, %v2449
        %v2482 = vpack.c.b16 %v2450, %v2450
        %v2483 = vpack.c.b16 %v2451, %v2451
        %v2484 = vpack.c.b16 %v2452, %v2452
        %v2485 = vpack.c.b16 %v2453, %v2453
        %v2486 = vpack.c.b16 %v2454, %v2454
        %v2487 = vpack.c.b16 %v2455, %v2455
        %v2488 = vpack.c.b16 %v2456, %v2456
        %v2489 = vpack.c.b16 %v2457, %v2457
        %v2490 = vpack.c.b16 %v2458, %v2458
        %v2491 = vpack.c.b16 %v2459, %v2459
        %v2492 = vpack.c.b16 %v2460, %v2460
        %v2493 = vpack.c.b16 %v2461, %v2461
        %v2494 = vpack.c.b16 %v2462, %v2462
        %2527 = vst [vmem:[%s409] sm:$0xf] %v2463
        %2528 = vst [vmem:[%s409 + $0x4] sm:$0xf] %v2464
        %2529 = vst [vmem:[%s409 + $0x8] sm:$0xf] %v2465
        %2530 = vst [vmem:[%s409 + $0xc] sm:$0xf] %v2466
        %2531 = vst [vmem:[%s409 + $0x10] sm:$0xf] %v2467
        %2532 = vst [vmem:[%s409 + $0x14] sm:$0xf] %v2468
        %2533 = vst [vmem:[%s409 + $0x18] sm:$0xf] %v2469
        %2534 = vst [vmem:[%s409 + $0x1c] sm:$0xf] %v2470
        %2535 = vst [vmem:[%s409 + $0x20] sm:$0xf] %v2471
        %2536 = vst [vmem:[%s409 + $0x24] sm:$0xf] %v2472
        %2537 = vst [vmem:[%s409 + $0x28] sm:$0xf] %v2473
        %2538 = vst [vmem:[%s409 + $0x2c] sm:$0xf] %v2474
        %2539 = vst [vmem:[%s409 + $0x30] sm:$0xf] %v2475
        %2540 = vst [vmem:[%s409 + $0x34] sm:$0xf] %v2476
        %2541 = vst [vmem:[%s409 + $0x38] sm:$0xf] %v2477
        %2542 = vst [vmem:[%s409 + $0x3c] sm:$0xf] %v2478
        %2543 = vst [vmem:[%s409 + $0x40] sm:$0xf] %v2479
        %2544 = vst [vmem:[%s409 + $0x44] sm:$0xf] %v2480
        %2545 = vst [vmem:[%s409 + $0x48] sm:$0xf] %v2481
        %2546 = vst [vmem:[%s409 + $0x4c] sm:$0xf] %v2482
        %2547 = vst [vmem:[%s409 + $0x50] sm:$0xf] %v2483
        %2548 = vst [vmem:[%s409 + $0x54] sm:$0xf] %v2484
        %2549 = vst [vmem:[%s409 + $0x58] sm:$0xf] %v2485
        %2550 = vst [vmem:[%s409 + $0x5c] sm:$0xf] %v2486
        %2551 = vst [vmem:[%s409 + $0x60] sm:$0xf] %v2487
        %2552 = vst [vmem:[%s409 + $0x64] sm:$0xf] %v2488
        %2553 = vst [vmem:[%s409 + $0x68] sm:$0xf] %v2489
        %2554 = vst [vmem:[%s409 + $0x6c] sm:$0xf] %v2490
        %2555 = vst [vmem:[%s409 + $0x70] sm:$0xf] %v2491
        %2556 = vst [vmem:[%s409 + $0x74] sm:$0xf] %v2492
        %2557 = vst [vmem:[%s409 + $0x78] sm:$0xf] %v2493
        %2558 = vst [vmem:[%s409 + $0x7c] sm:$0xf] %v2494
        %s2559 = sand.u32 %s249, 1
        %s2560 = scalar_lea.sflag [#allocation4], %s2559
        %s2561 = sand.u32 %s249, 1
        %s2562 = smul.addr %s2561, 128
        %s2563 = scalar_lea.vmem [#allocation5], %s2562
        %s2564 = sand.u32 %s277, 1
        %s2565 = scalar_lea.sflag [#allocation7], %s2564
        %s2566 = sand.u32 %s277, 1
        %s2567 = smul.addr %s2566, 128
        %s2568 = scalar_lea.vmem [#allocation6], %s2567
        // Predicated region
        $region61: #{tpu_custom_call.1} parent=55 // pred_check
          %p2569 = pneg %p259
        $region62: #{tpu_custom_call.1} parent=55 // pred_check_branch
          %2571 = sbr.rel (%p2569) target = $region64
        $region63: #{tpu_custom_call.1} parent=55 // pred_region
          %s2573 = ssub.s32 2048, 2048
          %2574 = vsyncadd %s2560, %s2573
          %s2575 = smul.addr %s35, 64
          %s2576 = sadd.s32 %s36, %s2575
          %s2577 = smul.addr %s2576, 64
          %s2578 = scalar_lea.hbm %s9, %s2577
          %s2579 = sshll.u32 %s2563, 4
          %s2580 = int_to_ptr.vmem [resolvable:$true] %s2579
          %2585 = dma.vmem_to_hbm [thread:$0]  %s2580, 2048, %s2578, %s2560, 64, 128, 4
        $region64: #{tpu_custom_call.1} parent=55 // pred_fallthru
          _
        // Predicated region
        $region65: #{tpu_custom_call.1} parent=55 // pred_check
          %p2586 = pneg %p287
        $region66: #{tpu_custom_call.1} parent=55 // pred_check_branch
          %2588 = sbr.rel (%p2586) target = $region68
        $region67: #{tpu_custom_call.1} parent=55 // pred_region
          %s2590 = ssub.s32 2048, 2048
          %2591 = vsyncadd %s2565, %s2590
          %s2592 = smul.addr %s35, 64
          %s2593 = sadd.s32 %s36, %s2592
          %s2594 = smul.addr %s2593, 64
          %s2595 = scalar_lea.hbm %s10, %s2594
          %s2596 = sshll.u32 %s2568, 4
          %s2597 = int_to_ptr.vmem [resolvable:$true] %s2596
          %2602 = dma.vmem_to_hbm [thread:$0]  %s2597, 2048, %s2595, %s2565, 64, 128, 4
        $region68: #{tpu_custom_call.1} parent=55 // pred_fallthru
          _
      $region56: #{tpu_custom_call.1} parent=5 // pred_fallthru
        _
      %p2603 = scmp.le.s32.totalorder 2, %s26
      // Predicated region
      $region69: #{tpu_custom_call.1} parent=5 // pred_check
        %p2604 = pneg %p2603
      $region70: #{tpu_custom_call.1} parent=5 // pred_check_branch
        %2606 = sbr.rel (%p2604) target = $region72
      $region71: #{tpu_custom_call.1} parent=5 // pred_region
        %s2607 = ssub.s32 %s26, 2
        // Predicated region
        $region73: #{tpu_custom_call.1} parent=71 // pred_check
          %p2608 = pneg %p265
        $region74: #{tpu_custom_call.1} parent=71 // pred_check_branch
          %2610 = sbr.rel (%p2608) target = $region76
        $region75: #{tpu_custom_call.1} parent=71 // pred_region
          %s2611 = sand.u32 %s250, 1
          %s2612 = scalar_lea.sflag [#allocation4], %s2611
          %s2613 = sand.u32 %s250, 1
          %s2614 = smul.addr %s2613, 128
          %s2615 = scalar_lea.vmem [#allocation5], %s2614
          %2616 = dma.done %s2612, 2048
        $region76: #{tpu_custom_call.1} parent=71 // pred_fallthru
          _
        // Predicated region
        $region77: #{tpu_custom_call.1} parent=71 // pred_check
          %p2617 = pneg %p293
        $region78: #{tpu_custom_call.1} parent=71 // pred_check_branch
          %2619 = sbr.rel (%p2617) target = $region80
        $region79: #{tpu_custom_call.1} parent=71 // pred_region
          %s2620 = sand.u32 %s278, 1
          %s2621 = scalar_lea.sflag [#allocation7], %s2620
          %s2622 = sand.u32 %s278, 1
          %s2623 = smul.addr %s2622, 128
          %s2624 = scalar_lea.vmem [#allocation6], %s2623
          %2625 = dma.done %s2621, 2048
        $region80: #{tpu_custom_call.1} parent=71 // pred_fallthru
          _
      $region72: #{tpu_custom_call.1} parent=5 // pred_fallthru
        _
    $region6: #{tpu_custom_call.1} parent=1 // loop_footer
      %s30 = sadd.s32 1, %s26
    $region7: #{tpu_custom_call.1} parent=1 // loop_footer_branch
      %25 = sbr.rel target = $region3
    $region8: #{tpu_custom_call.1} parent=1 // loop_exit
      _
    %2626 = vsyncpa [#allocation3], 1
    %s2627 = scalar_lea.sflag [#allocation3], 1
    %2628 = vsyncpa %s2627, 1
    %2629 = vsyncpa [#allocation4], 1
    %s2630 = scalar_lea.sflag [#allocation4], 1
    %2631 = vsyncpa %s2630, 1
    %2632 = vsyncpa [#allocation7], 1
    %s2633 = scalar_lea.sflag [#allocation7], 1
    %2634 = vsyncpa %s2633, 1

</llo_original>
